<compile_context>
chip_gen: v6e
topology: v6e:2x2x1
jax: 0.10.0
libtpu: 0.0.40
codegen_flags: <defaults>
</compile_context>

<pallas_src>
import jax
import jax.numpy as jnp
from jax import lax
from jax.experimental import pallas as pl
from jax.experimental.pallas import tpu as pltpu

THRESH = 1e-8   # CBP "thresh" for signed sqrt stability
L2_EPS = 1e-12  # eps of torch.nn.functional.normalize


def _round_up(x, m):
    return ((x + m - 1) // m) * m


def _cdiv(a, b):
    return (a + b - 1) // b


def _pick_lane_tile(d2):
    """Largest lane tile in {512,256,128} that divides d2 and gives >=2 blocks."""
    for t in (512, 256, 128):
        if d2 % t == 0 and d2 // t >= 2:
            return t
    return d2


def _pick_freq_tile(fh):
    """Lane tile for the frequency axis (falls back to full-dim for odd sizes)."""
    if fh % 128 == 0:
        for t in (512, 256, 128):
            if fh % t == 0:
                return t
    return fh


# ----------------------------------------------------------------------------
# Kernel 1: fused count-sketch projection  S = X @ [M1 | M2]
#   bf16 x bf16 -> f32 accumulate: single-pass native MXU path on all chips.
# ----------------------------------------------------------------------------
def sketch_kernel(x_ref, m_ref, s_ref):
    s_ref[...] = jnp.dot(x_ref[...], m_ref[...],
                         preferred_element_type=jnp.float32)


def sketch_project_fused(x_flat, m_fused, *, tn=512):
    """x_flat: (N, C) bf16, m_fused: (C, 2*D) bf16  ->  (N, 2*D) f32.

    X-stationary: the (tn, Cp) row tile stays resident while the inner grid
    axis streams (Cp, td) weight tiles; the weight is re-fetched ceil(N/tn)
    times total, which raising tn to 512 keeps small.  For very large C
    (>~4-5K) a K-axis reduction grid dim + f32 VMEM accumulator would be
    needed to stay inside the v7x 64 MiB VMEM; at CBP's typical C<=512 the
    full contraction stripe is cheap.
    """
    N, C = x_flat.shape
    D2 = m_fused.shape[1]

    Cp = _round_up(C, 128)  # contraction-dim zero padding: REQUIRED for correctness
    if Cp != C:
        x_flat = jnp.pad(x_flat, ((0, 0), (0, Cp - C)))
        m_fused = jnp.pad(m_fused, ((0, Cp - C), (0, 0)))

    tn = min(tn, _round_up(N, 8))
    td = _pick_lane_tile(D2)
    grid = (_cdiv(N, tn), D2 // td)  # ragged M edge handled by Pallas masking

    return pl.pallas_call(
        sketch_kernel,
        out_shape=jax.ShapeDtypeStruct((N, D2), jnp.float32),
        grid_spec=pltpu.PrefetchScalarGridSpec(
            num_scalar_prefetch=0,
            grid=grid,
            in_specs=[
                pl.BlockSpec((tn, Cp), lambda i, j: (i, 0)),   # row tile (stationary)
                pl.BlockSpec((Cp, td), lambda i, j: (0, j)),   # weight tile (streamed)
            ],
            out_specs=pl.BlockSpec((tn, td), lambda i, j: (i, j)),
        ),
        compiler_params=pltpu.CompilerParams(
            dimension_semantics=("parallel", "parallel"),
            vmem_limit_bytes=48 * 1024 * 1024,
        ),
    )(x_flat, m_fused)


# ----------------------------------------------------------------------------
# Kernel 2: frequency-domain complex product + spatial reduction
#   out[b, :, f] = sum_p (S1[b, p, f] * S2[b, p, f])   (complex multiply)
# Inputs are packed as (B, 2, HW, Fh) with plane 0 = real, plane 1 = imag,
# Fh = D/2 (DC bin included; Nyquist bin handled outside).
# Grid: (batch [parallel], freq tiles [parallel], HW chunks [arbitrary, last]).
# ----------------------------------------------------------------------------
def freq_product_sum(s1, s2, *, thw=512):
    """s1, s2: (B, 2, HW, Fh) f32  ->  (B, 2, Fh) f32, summed over HW."""
    B, _, HW, Fh = s1.shape
    thw = min(thw, HW)
    tF = _pick_freq_tile(Fh)
    nF = Fh // tF
    nHW = _cdiv(HW, thw)
    ragged = (HW % thw) != 0

    def freqsum_kernel(s1_ref, s2_ref, o_ref, acc_ref):
        h = pl.program_id(2)

        @pl.when(h == 0)
        def _():
            acc_ref[...] = jnp.zeros_like(acc_ref)

        a = s1_ref[...]                    # (2, thw, tF)
        b = s2_ref[...]
        ar, ai = a[0], a[1]
        br, bi = b[0], b[1]
        pre = ar * br - ai * bi
        pim = ar * bi + ai * br
        if ragged:
            # mask garbage rows of the last (partial) HW chunk before they
            # enter the accumulator.
            rows = lax.broadcasted_iota(jnp.int32, pre.shape, 0)
            keep = rows < (HW - h * thw)
            pre = jnp.where(keep, pre, 0.0)
            pim = jnp.where(keep, pim, 0.0)
        # hot loop: pure elementwise VPU adds; no cross-sublane work here.
        acc_ref[0, :, :] += pre
        acc_ref[1, :, :] += pim

        @pl.when(h == pl.num_programs(2) - 1)
        def _():
            o_ref[...] = jnp.sum(acc_ref[...], axis=1, keepdims=True)

    in_spec = pl.BlockSpec((None, 2, thw, tF), lambda b, jf, h: (b, 0, h, jf))
    out_spec = pl.BlockSpec((None, 2, 1, tF), lambda b, jf, h: (b, 0, 0, jf))

    o = pl.pallas_call(
        freqsum_kernel,
        out_shape=jax.ShapeDtypeStruct((B, 2, 1, Fh), jnp.float32),
        grid_spec=pltpu.PrefetchScalarGridSpec(
            num_scalar_prefetch=0,
            grid=(B, nF, nHW),
            in_specs=[in_spec, in_spec],
            out_specs=out_spec,
            scratch_shapes=[pltpu.VMEM((2, thw, tF), jnp.float32)],
        ),
        compiler_params=pltpu.CompilerParams(
            dimension_semantics=("parallel", "parallel", "arbitrary"),
            vmem_limit_bytes=48 * 1024 * 1024,
        ),
    )(s1, s2)
    return o[:, :, 0, :]


# ----------------------------------------------------------------------------
# Parameter construction (deterministic, mirrors CBP.__init__ semantics)
# ----------------------------------------------------------------------------
def make_cbp_params(key, input_dim, proj_dim):
    k1, k2, k3, k4 = jax.random.split(key, 4)
    h1 = jax.random.randint(k1, (input_dim,), 0, proj_dim)
    h2 = jax.random.randint(k2, (input_dim,), 0, proj_dim)
    w1 = (2 * jax.random.randint(k3, (input_dim,), 0, 2) - 1).astype(jnp.float32)
    w2 = (2 * jax.random.randint(k4, (input_dim,), 0, 2) - 1).astype(jnp.float32)
    m1 = jax.nn.one_hot(h1, proj_dim, dtype=jnp.float32) * w1[:, None]
    m2 = jax.nn.one_hot(h2, proj_dim, dtype=jnp.float32) * w2[:, None]
    return m1, m2


# ----------------------------------------------------------------------------
# CBP forward (dimension_reduction=None path of the PyTorch module)
# ----------------------------------------------------------------------------
def cbp_forward(x_nchw, m1, m2):
    B, C, H, W = x_nchw.shape
    D = m1.shape[1]
    HW = H * W
    assert D % 2 == 0, "projDim must be even for the rfft half-spectrum path"

    # NCHW -> (B*H*W, C), same pixel ordering as the PyTorch reference.
    x_flat = jnp.transpose(x_nchw, (0, 2, 3, 1)).reshape(-1, C)

    # Fused count-sketch projection on the native bf16 MXU path.
    # bf16 is lossless for the {-1, 0, +1} weight entries; x is rounded once.
    m_fused = jnp.concatenate([m1, m2], axis=1).astype(jnp.bfloat16)
    s = sketch_project_fused(x_flat.astype(jnp.bfloat16), m_fused)   # (N, 2D) f32
    s = s.reshape(B, HW, 2 * D)            # contiguous reshape: no copy
    s1, s2 = s[..., :D], s[..., D:]

    # Sketches are real -> rfft halves FFT work and the freqsum HBM traffic.
    # TODO(synk): FFT/IFFT have no Pallas TPU primitive; jnp.fft glue (linear ops).
    Fh = D // 2                            # kernel handles bins 0 .. D/2-1
    s1f = jnp.fft.rfft(s1, axis=-1)
    s2f = jnp.fft.rfft(s2, axis=-1)

    def stack_ri(sf):                      # (B, HW, F) c64 -> (B, 2, HW, Fh) f32
        return jnp.stack(
            [jnp.real(sf[..., :Fh]), jnp.imag(sf[..., :Fh])], axis=1
        ).astype(jnp.float32)

    # complex product + spatial sum (Pallas, tiled & accumulating).
    # sum-then-ifft == ifft-then-sum (linearity), matching the reference math.
    p = freq_product_sum(stack_ri(s1f), stack_ri(s2f))     # (B, 2, Fh)
    p_re, p_im = p[:, 0, :], p[:, 1, :]

    # Nyquist bin is purely real: its product + spatial sum is a tiny (B, HW)
    # elementwise op, left to plain jnp.
    nyq = jnp.sum(jnp.real(s1f[..., Fh]) * jnp.real(s2f[..., Fh]), axis=1)

    spec = jnp.concatenate(
        [(p_re + 1j * p_im).astype(jnp.complex64),
         nyq[:, None].astype(jnp.complex64)], axis=-1)      # (B, D/2+1)
    y = jnp.fft.irfft(spec, n=D, axis=-1).astype(jnp.float32)

    # signed sqrt + L2 norm on a tiny (B, projDim) tensor: plain jnp (XLA fuses).
    y = jnp.sign(y) * jnp.sqrt(jnp.abs(y) + THRESH)
    norm = jnp.sqrt(jnp.sum(y * y, axis=1, keepdims=True))
    return y / jnp.maximum(norm, L2_EPS)


# pure-JAX reference (mirrors the PyTorch forward) for a sanity check
def cbp_reference(x_nchw, m1, m2):
    B, C, H, W = x_nchw.shape
    xf = jnp.transpose(x_nchw, (0, 2, 3, 1)).reshape(-1, C)
    s1 = jnp.fft.fft(xf @ m1, axis=-1)
    s2 = jnp.fft.fft(xf @ m2, axis=-1)
    t = jnp.real(jnp.fft.ifft(s1 * s2, axis=-1)).reshape(B, H * W, -1).sum(axis=1)
    y = jnp.sign(t) * jnp.sqrt(jnp.abs(t) + THRESH)
    n = jnp.sqrt(jnp.sum(y * y, axis=1, keepdims=True))
    return y / jnp.maximum(n, L2_EPS)


if __name__ == "__main__":
    # small, module-consistent shapes: batch=2, input_dim=64, spatial=8x8,
    # projDim=256, dimension_reduction=None
    B, C, H, W = 2, 64, 8, 8
    PROJ_DIM = 256

    key = jax.random.PRNGKey(0)
    kx, kp = jax.random.split(key)
    x = jax.random.normal(kx, (B, C, H, W), dtype=jnp.float32)
    m1, m2 = make_cbp_params(kp, C, PROJ_DIM)

    out = jax.block_until_ready(jax.jit(cbp_forward)(x, m1, m2))

    # sanity check: the reference rounds x to bf16 exactly like the reviewed
    # MXU-native kernel path does, so the comparison isolates kernel math.
    x_bf = x.astype(jnp.bfloat16).astype(jnp.float32)
    ref = jax.block_until_ready(cbp_reference(x_bf, m1, m2))
    assert out.shape == (B, PROJ_DIM)
    assert jnp.allclose(out, ref, rtol=1e-3, atol=1e-3), \
        float(jnp.max(jnp.abs(out - ref)))

    print("KERNEL_OK")
</pallas_src>

<mosaic_0001>
module attributes {stable_mosaic.version = 11 : i64} {
  func.func @sketch_kernel(%arg0: i32, %arg1: i32, %arg2: memref<128x128xbf16, #tpu.memory_space<vmem>>, %arg3: memref<128x256xbf16, #tpu.memory_space<vmem>>, %arg4: memref<128x256xf32, #tpu.memory_space<vmem>>) attributes {dimension_semantics = [#tpu.dimension_semantics<parallel>, #tpu.dimension_semantics<parallel>], iteration_bounds = array<i64: 1, 2>, scalar_prefetch = 0 : i64, scratch_operands = 0 : i64, tpu.core_type = #tpu.core_type<tc>, window_params = [{transform_indices = @transform_0, window_bounds = array<i64: 128, 128>}, {transform_indices = @transform_1, window_bounds = array<i64: 128, 256>}, {transform_indices = @transform_2, window_bounds = array<i64: 128, 256>}]} {
    %c0 = arith.constant 0 : index
    %c0_0 = arith.constant 0 : index
    %0 = vector.load %arg2[%c0, %c0_0] : memref<128x128xbf16, #tpu.memory_space<vmem>>, vector<128x128xbf16>
    %c0_1 = arith.constant 0 : index
    %c0_2 = arith.constant 0 : index
    %1 = vector.load %arg3[%c0_1, %c0_2] : memref<128x256xbf16, #tpu.memory_space<vmem>>, vector<128x256xbf16>
    %cst = arith.constant dense<0.000000e+00> : vector<128x256xf32>
    %2 = tpu.matmul %0, %1, %cst {dimension_numbers = #tpu.dot_dimension_numbers<[1], [0], [0], [1], [0, 0, 1, 1], [], []>} : vector<128x128xbf16>, vector<128x256xbf16>, vector<128x256xf32> -> vector<128x256xf32>
    %c0_3 = arith.constant 0 : index
    %c0_4 = arith.constant 0 : index
    %3 = vector.load %arg4[%c0_3, %c0_4] : memref<128x256xf32, #tpu.memory_space<vmem>>, vector<128x256xf32>
    tpu.vector_store %arg4[%c0_3, %c0_4], %2 {strides = array<i32>} : memref<128x256xf32, #tpu.memory_space<vmem>>, vector<128x256xf32>,
    return
  }
  func.func @transform_0(%arg0: i32, %arg1: i32) -> (i32, i32) {
    %c0_i32 = arith.constant 0 : i32
    %c0_i32_0 = arith.constant 0 : i32
    return %arg0, %c0_i32 : i32, i32
  }
  func.func @transform_1(%arg0: i32, %arg1: i32) -> (i32, i32) {
    %c0_i32 = arith.constant 0 : i32
    %c0_i32_0 = arith.constant 0 : i32
    return %c0_i32, %arg1 : i32, i32
  }
  func.func @transform_2(%arg0: i32, %arg1: i32) -> (i32, i32) {
    %c0_i32 = arith.constant 0 : i32
    return %arg0, %arg1 : i32, i32
  }
}

module attributes {stable_mosaic.version = 11 : i64} {
  func.func @freqsum_kernel(%arg0: i32, %arg1: i32, %arg2: i32, %arg3: memref<1x2x64x128xf32, #tpu.memory_space<vmem>>, %arg4: memref<1x2x64x128xf32, #tpu.memory_space<vmem>>, %arg5: memref<1x2x1x128xf32, #tpu.memory_space<vmem>>, %arg6: memref<2x64x128xf32, #tpu.memory_space<vmem>>) attributes {dimension_semantics = [#tpu.dimension_semantics<parallel>, #tpu.dimension_semantics<parallel>, #tpu.dimension_semantics<arbitrary>], iteration_bounds = array<i64: 2, 1, 1>, scalar_prefetch = 0 : i64, scratch_operands = 1 : i64, tpu.core_type = #tpu.core_type<tc>, window_params = [{transform_indices = @transform_0, window_bounds = array<i64: 1, 2, 64, 128>}, {transform_indices = @transform_1, window_bounds = array<i64: 1, 2, 64, 128>}, {transform_indices = @transform_2, window_bounds = array<i64: 1, 2, 1, 128>}]} {
    %c0_i32 = arith.constant 0 : i32
    %0 = arith.cmpi eq, %arg2, %c0_i32 : i32
    %1 = arith.extui %0 : i1 to i32
    %c0_i32_0 = arith.constant 0 : i32
    %2 = arith.cmpi ne, %1, %c0_i32_0 : i32
    scf.if %2 {
      %cst = arith.constant 0.000000e+00 : f32
      %36 = vector.broadcast %cst : f32 to vector<2x64x128xf32>
      %c0_21 = arith.constant 0 : index
      %c0_22 = arith.constant 0 : index
      %c0_23 = arith.constant 0 : index
      %37 = vector.load %arg6[%c0_21, %c0_22, %c0_23] : memref<2x64x128xf32, #tpu.memory_space<vmem>>, vector<2x64x128xf32>
      tpu.vector_store %arg6[%c0_21, %c0_22, %c0_23], %36 {strides = array<i32>} : memref<2x64x128xf32, #tpu.memory_space<vmem>>, vector<2x64x128xf32>,
    } else {
    }
    %c0 = arith.constant 0 : index
    %c0_1 = arith.constant 0 : index
    %c0_2 = arith.constant 0 : index
    %c0_3 = arith.constant 0 : index
    %3 = vector.load %arg3[%c0, %c0_1, %c0_2, %c0_3] : memref<1x2x64x128xf32, #tpu.memory_space<vmem>>, vector<1x2x64x128xf32>
    %4 = vector.shape_cast %3 : vector<1x2x64x128xf32> to vector<2x64x128xf32>
    %c0_4 = arith.constant 0 : index
    %c0_5 = arith.constant 0 : index
    %c0_6 = arith.constant 0 : index
    %c0_7 = arith.constant 0 : index
    %5 = vector.load %arg4[%c0_4, %c0_5, %c0_6, %c0_7] : memref<1x2x64x128xf32, #tpu.memory_space<vmem>>, vector<1x2x64x128xf32>
    %6 = vector.shape_cast %5 : vector<1x2x64x128xf32> to vector<2x64x128xf32>
    %7 = vector.extract_strided_slice %4 {offsets = [0, 0, 0], sizes = [1, 64, 128], strides = [1, 1, 1]} : vector<2x64x128xf32> to vector<1x64x128xf32>
    %8 = vector.shape_cast %7 : vector<1x64x128xf32> to vector<64x128xf32>
    %9 = vector.extract_strided_slice %4 {offsets = [1, 0, 0], sizes = [1, 64, 128], strides = [1, 1, 1]} : vector<2x64x128xf32> to vector<1x64x128xf32>
    %10 = vector.shape_cast %9 : vector<1x64x128xf32> to vector<64x128xf32>
    %11 = vector.extract_strided_slice %6 {offsets = [0, 0, 0], sizes = [1, 64, 128], strides = [1, 1, 1]} : vector<2x64x128xf32> to vector<1x64x128xf32>
    %12 = vector.shape_cast %11 : vector<1x64x128xf32> to vector<64x128xf32>
    %13 = vector.extract_strided_slice %6 {offsets = [1, 0, 0], sizes = [1, 64, 128], strides = [1, 1, 1]} : vector<2x64x128xf32> to vector<1x64x128xf32>
    %14 = vector.shape_cast %13 : vector<1x64x128xf32> to vector<64x128xf32>
    %15 = arith.mulf %8, %12 : vector<64x128xf32>
    %16 = arith.mulf %10, %14 : vector<64x128xf32>
    %17 = arith.subf %15, %16 : vector<64x128xf32>
    %18 = arith.mulf %8, %14 : vector<64x128xf32>
    %19 = arith.mulf %10, %12 : vector<64x128xf32>
    %20 = arith.addf %18, %19 : vector<64x128xf32>
    %c0_8 = arith.constant 0 : index
    %c0_9 = arith.constant 0 : index
    %c0_10 = arith.constant 0 : index
    %21 = vector.load %arg6[%c0_8, %c0_9, %c0_10] : memref<2x64x128xf32, #tpu.memory_space<vmem>>, vector<1x64x128xf32>
    %22 = vector.shape_cast %21 : vector<1x64x128xf32> to vector<64x128xf32>
    %23 = arith.addf %22, %17 : vector<64x128xf32>
    %c0_11 = arith.constant 0 : index
    %c0_12 = arith.constant 0 : index
    %c0_13 = arith.constant 0 : index
    %24 = vector.load %arg6[%c0_11, %c0_12, %c0_13] : memref<2x64x128xf32, #tpu.memory_space<vmem>>, vector<1x64x128xf32>
    %25 = vector.shape_cast %24 : vector<1x64x128xf32> to vector<64x128xf32>
    %26 = vector.shape_cast %23 : vector<64x128xf32> to vector<1x64x128xf32>
    tpu.vector_store %arg6[%c0_11, %c0_12, %c0_13], %26 {strides = array<i32>} : memref<2x64x128xf32, #tpu.memory_space<vmem>>, vector<1x64x128xf32>,
    %c1 = arith.constant 1 : index
    %c0_14 = arith.constant 0 : index
    %c0_15 = arith.constant 0 : index
    %27 = vector.load %arg6[%c1, %c0_14, %c0_15] : memref<2x64x128xf32, #tpu.memory_space<vmem>>, vector<1x64x128xf32>
    %28 = vector.shape_cast %27 : vector<1x64x128xf32> to vector<64x128xf32>
    %29 = arith.addf %28, %20 : vector<64x128xf32>
    %c1_16 = arith.constant 1 : index
    %c0_17 = arith.constant 0 : index
    %c0_18 = arith.constant 0 : index
    %30 = vector.load %arg6[%c1_16, %c0_17, %c0_18] : memref<2x64x128xf32, #tpu.memory_space<vmem>>, vector<1x64x128xf32>
    %31 = vector.shape_cast %30 : vector<1x64x128xf32> to vector<64x128xf32>
    %32 = vector.shape_cast %29 : vector<64x128xf32> to vector<1x64x128xf32>
    tpu.vector_store %arg6[%c1_16, %c0_17, %c0_18], %32 {strides = array<i32>} : memref<2x64x128xf32, #tpu.memory_space<vmem>>, vector<1x64x128xf32>,
    %c0_i32_19 = arith.constant 0 : i32
    %33 = arith.cmpi eq, %arg2, %c0_i32_19 : i32
    %34 = arith.extui %33 : i1 to i32
    %c0_i32_20 = arith.constant 0 : i32
    %35 = arith.cmpi ne, %34, %c0_i32_20 : i32
    scf.if %35 {
      %c0_21 = arith.constant 0 : index
      %c0_22 = arith.constant 0 : index
      %c0_23 = arith.constant 0 : index
      %36 = vector.load %arg6[%c0_21, %c0_22, %c0_23] : memref<2x64x128xf32, #tpu.memory_space<vmem>>, vector<2x64x128xf32>
      %cst = arith.constant dense<0.000000e+00> : vector<2x128xf32>
      %37 = vector.multi_reduction <add>, %36, %cst [1] : vector<2x64x128xf32> to vector<2x128xf32>
      %38 = vector.shape_cast %37 : vector<2x128xf32> to vector<2x1x128xf32>
      %c0_24 = arith.constant 0 : index
      %c0_25 = arith.constant 0 : index
      %c0_26 = arith.constant 0 : index
      %c0_27 = arith.constant 0 : index
      %39 = vector.load %arg5[%c0_24, %c0_25, %c0_26, %c0_27] : memref<1x2x1x128xf32, #tpu.memory_space<vmem>>, vector<1x2x1x128xf32>
      %40 = vector.shape_cast %39 : vector<1x2x1x128xf32> to vector<2x1x128xf32>
      %41 = vector.shape_cast %38 : vector<2x1x128xf32> to vector<1x2x1x128xf32>
      tpu.vector_store %arg5[%c0_24, %c0_25, %c0_26, %c0_27], %41 {strides = array<i32>} : memref<1x2x1x128xf32, #tpu.memory_space<vmem>>, vector<1x2x1x128xf32>,
    } else {
    }
    return
  }
  func.func @transform_0(%arg0: i32, %arg1: i32, %arg2: i32) -> (i32, i32, i32, i32) {
    %c0_i32 = arith.constant 0 : i32
    %c0_i32_0 = arith.constant 0 : i32
    return %arg0, %c0_i32, %arg2, %arg1 : i32, i32, i32, i32
  }
  func.func @transform_1(%arg0: i32, %arg1: i32, %arg2: i32) -> (i32, i32, i32, i32) {
    %c0_i32 = arith.constant 0 : i32
    %c0_i32_0 = arith.constant 0 : i32
    return %arg0, %c0_i32, %arg2, %arg1 : i32, i32, i32, i32
  }
  func.func @transform_2(%arg0: i32, %arg1: i32, %arg2: i32) -> (i32, i32, i32, i32) {
    %c0_i32 = arith.constant 0 : i32
    %c0_i32_0 = arith.constant 0 : i32
    %c0_i32_1 = arith.constant 0 : i32
    return %arg0, %c0_i32, %c0_i32_0, %arg1 : i32, i32, i32, i32
  }
}

</mosaic_0001>

<llo_original>
// kernel: cbp_forward.2
$region0: #{cbp_forward.2}
  #allocation0 [shape = 'u32[]', space=smem, size = 0x4, offset = 0x4, fixed_abs, tag = 'smem constant byte address 0x4 - core index']
  #allocation1 [shape = 'u32[144,128]{1,0:T(1,128)}', space=vmem, size = 0x12000, scoped, tag = 'internal scratch']
  %s0 = inlined_call_operand.vmem [shape: bf16[128,128], index: 0, kind: input, shape index: {}]
  %s1 = inlined_call_operand.vmem [shape: bf16[128,512], index: 1, kind: input, shape index: {}]
  %s2 = inlined_call_operand.vmem [shape: f32[128,512], index: 2, kind: output, shape index: {}]
  %s3 = sld [smem:[#allocation0]]
  $region98: #{cbp_forward.2} parent=0
    _
  %s5 = ssub.s32 1, %s3
  %s6 = scalar_select 0, %s5, %s3
  $region1: #{cbp_forward.2} parent=0
    #allocation2 [shape = 'u8[131072]{0}', space=vmem, size = 0x20000, scoped, tag = 'input window, operand 1']
    #allocation3 [shape = 'u8[262144]{0}', space=vmem, size = 0x40000, scoped, tag = 'output window, operand 0']
    loop: start=0, step=1, limit=4
    $region2: #{cbp_forward.2} parent=1 // loop_pre_header
      _
    $region3: #{cbp_forward.2} parent=1 // loop_header
      %s8 = sphi 0, %s12
      %p9 = scmp.ge.s32.totalorder %s8, 4
      %s15 = sphi 0, %s27
      %s16 = sphi 0, %s23
      %s17 = sphi 0, %s15
      %s18 = sphi 0, %s16
      %s19 = sphi 0, %s17
      %s20 = sphi 0, %s18
      %s30 = sphi 0, %s32
      %s33 = sphi 0, %s30
      %s34 = sphi 0, %s33
      %s50 = sphi 0, %s34
      %s56 = sphi 0, %s58
      %s59 = sphi 0, %s56
      %s60 = sphi 0, %s59
      %s76 = sphi 0, %s60
      %s84 = sphi 0, %s86
      %s87 = sphi 0, %s84
      %s88 = sphi 0, %s87
      %s104 = sphi 0, %s88
    $region4: #{cbp_forward.2} parent=1 // loop_header_branch
      %11 = sbr.rel (%p9) target = $region8
    $region5: #{cbp_forward.2} parent=1 // loop_body
      %s13 = ssub.s32 %s8, 1
      %s14 = ssub.s32 %s8, 2
      %s21 = sadd.s32 1, %s16
      %p22 = scmp.ge.s32.totalorder %s21, 2
      %s23 = scalar_select %p22, 0, %s21
      %s24 = sadd.s32 1, %s15
      %s25 = scalar_select %p22, %s24, %s15
      %p26 = scmp.ge.s32.totalorder %s25, 1
      %s27 = scalar_select %p26, 0, %s25
      %s28 = ssub.s32 %s15, %s27
      %p29 = scmp.eq.s32.totalorder %s28, 0
      %s31 = sadd.s32 %s30, 1
      %s32 = scalar_select %p29, %s30, %s31
      %p35 = pneg %p29
      %p36 = scmp.eq.s32.totalorder %s8, 1
      %p37 = por %p35, %p36
      %p38 = scmp.ne.s32.totalorder %s30, %s33
      %p39 = scmp.eq.s32.totalorder %s8, 0
      %p40 = por %p38, %p39
      %p41 = scmp.ne.s32.totalorder %s30, %s33
      %p42 = scmp.eq.s32.totalorder %s13, 1
      %p43 = por %p41, %p42
      %p44 = scmp.ne.s32.totalorder %s33, %s34
      %p45 = scmp.eq.s32.totalorder %s13, 0
      %p46 = por %p44, %p45
      %p47 = scmp.ne.s32.totalorder %s33, %s34
      %p48 = scmp.eq.s32.totalorder %s14, 1
      %p49 = por %p47, %p48
      %p51 = scmp.ne.s32.totalorder %s34, %s50
      %p52 = scmp.eq.s32.totalorder %s14, 0
      %p53 = por %p51, %p52
      %s54 = ssub.s32 %s16, %s23
      %p55 = scmp.eq.s32.totalorder %s54, 0
      %s57 = sadd.s32 %s56, 1
      %s58 = scalar_select %p55, %s56, %s57
      %p61 = pneg %p55
      %p62 = scmp.eq.s32.totalorder %s8, 1
      %p63 = por %p61, %p62
      %p64 = scmp.ne.s32.totalorder %s56, %s59
      %p65 = scmp.eq.s32.totalorder %s8, 0
      %p66 = por %p64, %p65
      %p67 = scmp.ne.s32.totalorder %s56, %s59
      %p68 = scmp.eq.s32.totalorder %s13, 1
      %p69 = por %p67, %p68
      %p70 = scmp.ne.s32.totalorder %s59, %s60
      %p71 = scmp.eq.s32.totalorder %s13, 0
      %p72 = por %p70, %p71
      %p73 = scmp.ne.s32.totalorder %s59, %s60
      %p74 = scmp.eq.s32.totalorder %s14, 1
      %p75 = por %p73, %p74
      %p77 = scmp.ne.s32.totalorder %s60, %s76
      %p78 = scmp.eq.s32.totalorder %s14, 0
      %p79 = por %p77, %p78
      %s80 = ssub.s32 %s15, %s27
      %s81 = ssub.s32 %s16, %s23
      %s82 = sor.u32 %s80, %s81
      %p83 = scmp.eq.s32.totalorder %s82, 0
      %s85 = sadd.s32 %s84, 1
      %s86 = scalar_select %p83, %s84, %s85
      %p89 = pneg %p83
      %p90 = scmp.eq.s32.totalorder %s8, 1
      %p91 = por %p89, %p90
      %p92 = scmp.ne.s32.totalorder %s84, %s87
      %p93 = scmp.eq.s32.totalorder %s8, 0
      %p94 = por %p92, %p93
      %p95 = scmp.ne.s32.totalorder %s84, %s87
      %p96 = scmp.eq.s32.totalorder %s13, 1
      %p97 = por %p95, %p96
      %p98 = scmp.ne.s32.totalorder %s87, %s88
      %p99 = scmp.eq.s32.totalorder %s13, 0
      %p100 = por %p98, %p99
      %p101 = scmp.ne.s32.totalorder %s87, %s88
      %p102 = scmp.eq.s32.totalorder %s14, 1
      %p103 = por %p101, %p102
      %p105 = scmp.ne.s32.totalorder %s88, %s104
      %p106 = scmp.eq.s32.totalorder %s14, 0
      %p107 = por %p105, %p106
      %p108 = scmp.le.s32.totalorder 1, %s8
      %p109 = scmp.lt.s32.totalorder %s8, 3
      %p110 = pnand %p108, %p109
      %p111 = pneg %p110
      // Predicated region
      $region9: #{cbp_forward.2} parent=5 // pred_check
        _
      $region10: #{cbp_forward.2} parent=5 // pred_check_branch
        %113 = sbr.rel (%p110) target = $region12
      $region11: #{cbp_forward.2} parent=5 // pred_region
        %s114 = ssub.s32 %s8, 1
        // Predicated region
        $region13: #{cbp_forward.2} parent=11 // pred_check
          %p115 = pneg %p46
        $region14: #{cbp_forward.2} parent=11 // pred_check_branch
          %117 = sbr.rel (%p115) target = $region16
        $region15: #{cbp_forward.2} parent=11 // pred_region
          %s118 = smul.u32 16, %s17
          %p119 = scmp.lt.s32.totalorder %s118, 15
          %s120 = scalar_select %p119, %s118, 15
          %s121 = smul.addr %s120, 4
          %s122 = scalar_lea.vmem %s0, %s121
          %s123 = smul.u32 16, %s17
        $region16: #{cbp_forward.2} parent=11 // pred_fallthru
          _
      $region12: #{cbp_forward.2} parent=5 // pred_fallthru
        _
      %p124 = scmp.lt.s32.totalorder %s8, 2
      // Predicated region
      $region17: #{cbp_forward.2} parent=5 // pred_check
        %p125 = pneg %p124
      $region18: #{cbp_forward.2} parent=5 // pred_check_branch
        %127 = sbr.rel (%p125) target = $region20
      $region19: #{cbp_forward.2} parent=5 // pred_region
        // Predicated region
        $region21: #{cbp_forward.2} parent=19 // pred_check
          %p128 = pneg %p66
        $region22: #{cbp_forward.2} parent=19 // pred_check_branch
          %130 = sbr.rel (%p128) target = $region24
        $region23: #{cbp_forward.2} parent=19 // pred_region
          %s131 = sand.u32 %s56, 1
          %s132 = sand.u32 %s56, 1
          %s133 = smul.addr %s132, 128
          %s134 = scalar_lea.vmem [#allocation2], %s133
          %s135 = smul.u32 2, %s16
          %s136 = smul.addr %s135, 4
          %s137 = scalar_lea.vmem %s1, %s136
          // Predicated region
          $region25: #{cbp_forward.2} parent=23 // pred_check
            _
          $region26: #{cbp_forward.2} parent=23 // pred_check_branch
            %139 = sbr.rel (0) target = $region28
          $region27: #{cbp_forward.2} parent=23 // pred_region
            // Predicated region
            $region29: #{cbp_forward.2} parent=27 // pred_check
              _
            $region30: #{cbp_forward.2} parent=27 // pred_check_branch
              %141 = sbr.rel (0) target = $region32
            $region31: #{cbp_forward.2} parent=27 // pred_region
              // Predicated region
              $region44: #{cbp_forward.2} parent=31 // pred_check
                _
              $region45: #{cbp_forward.2} parent=31 // pred_check_branch
                %187 = sbr.rel (0) target = $region47
              $region46: #{cbp_forward.2} parent=31 // pred_region
                loop: start=0, step=1, limit=1
                $region48: #{cbp_forward.2} parent=46 // loop_pre_header
                  _
                $region49: #{cbp_forward.2} parent=46 // loop_header
                  %s189 = sphi 0, %s193
                  %p190 = scmp.ge.s32.totalorder %s189, 1
                  %s194 = sphi %s137, %s137
                  %s195 = sphi %s134, %s134
                $region50: #{cbp_forward.2} parent=46 // loop_header_branch
                  %192 = sbr.rel (%p190) target = $region54
                $region51: #{cbp_forward.2} parent=46 // loop_body
                  %v196 = vld [vmem:[%s194] sm:$0xff]
                  %197 = vst [vmem:[%s195] sm:$0xff] %v196
                  %v198 = vld [vmem:[%s194 + $0x10] sm:$0xff]
                  %199 = vst [vmem:[%s195 + $0x8] sm:$0xff] %v198
                  %v200 = vld [vmem:[%s194 + $0x20] sm:$0xff]
                  %201 = vst [vmem:[%s195 + $0x10] sm:$0xff] %v200
                  %v202 = vld [vmem:[%s194 + $0x30] sm:$0xff]
                  %203 = vst [vmem:[%s195 + $0x18] sm:$0xff] %v202
                  %v204 = vld [vmem:[%s194 + $0x40] sm:$0xff]
                  %205 = vst [vmem:[%s195 + $0x20] sm:$0xff] %v204
                  %v206 = vld [vmem:[%s194 + $0x50] sm:$0xff]
                  %207 = vst [vmem:[%s195 + $0x28] sm:$0xff] %v206
                  %v208 = vld [vmem:[%s194 + $0x60] sm:$0xff]
                  %209 = vst [vmem:[%s195 + $0x30] sm:$0xff] %v208
                  %v210 = vld [vmem:[%s194 + $0x70] sm:$0xff]
                  %211 = vst [vmem:[%s195 + $0x38] sm:$0xff] %v210
                  %v212 = vld [vmem:[%s194 + $0x80] sm:$0xff]
                  %213 = vst [vmem:[%s195 + $0x40] sm:$0xff] %v212
                  %v214 = vld [vmem:[%s194 + $0x90] sm:$0xff]
                  %215 = vst [vmem:[%s195 + $0x48] sm:$0xff] %v214
                  %v216 = vld [vmem:[%s194 + $0xa0] sm:$0xff]
                  %217 = vst [vmem:[%s195 + $0x50] sm:$0xff] %v216
                  %v218 = vld [vmem:[%s194 + $0xb0] sm:$0xff]
                  %219 = vst [vmem:[%s195 + $0x58] sm:$0xff] %v218
                  %v220 = vld [vmem:[%s194 + $0xc0] sm:$0xff]
                  %221 = vst [vmem:[%s195 + $0x60] sm:$0xff] %v220
                  %v222 = vld [vmem:[%s194 + $0xd0] sm:$0xff]
                  %223 = vst [vmem:[%s195 + $0x68] sm:$0xff] %v222
                  %v224 = vld [vmem:[%s194 + $0xe0] sm:$0xff]
                  %225 = vst [vmem:[%s195 + $0x70] sm:$0xff] %v224
                  %v226 = vld [vmem:[%s194 + $0xf0] sm:$0xff]
                  %227 = vst [vmem:[%s195 + $0x78] sm:$0xff] %v226
                $region52: #{cbp_forward.2} parent=46 // loop_footer
                  %s193 = sadd.s32 1, %s189
                $region53: #{cbp_forward.2} parent=46 // loop_footer_branch
                  %188 = sbr.rel target = $region49
                $region54: #{cbp_forward.2} parent=46 // loop_exit
                  _
              $region47: #{cbp_forward.2} parent=31 // pred_fallthru
                _
              // Predicated region
              $region55: #{cbp_forward.2} parent=31 // pred_check
                _
              $region56: #{cbp_forward.2} parent=31 // pred_check_branch
                %229 = sbr.rel target = $region58
              $region57: #{cbp_forward.2} parent=31 // pred_region
                _
              $region58: #{cbp_forward.2} parent=31 // pred_fallthru
                _
            $region32: #{cbp_forward.2} parent=27 // pred_fallthru
              _
            // Predicated region
            $region33: #{cbp_forward.2} parent=27 // pred_check
              _
            $region34: #{cbp_forward.2} parent=27 // pred_check_branch
              %143 = sbr.rel target = $region36
            $region35: #{cbp_forward.2} parent=27 // pred_region
              %s145 = ssub.s32 256, 1
              loop: start=0, step=1, limit=1
              $region37: #{cbp_forward.2} parent=35 // loop_pre_header
                _
              $region38: #{cbp_forward.2} parent=35 // loop_header
                %s147 = sphi 0, %s151
                %p148 = scmp.ge.s32.totalorder %s147, 1
                %s152 = sphi %s137, %s137
                %s153 = sphi %s134, %s134
              $region39: #{cbp_forward.2} parent=35 // loop_header_branch
                %150 = sbr.rel (%p148) target = $region43
              $region40: #{cbp_forward.2} parent=35 // loop_body
                %v154 = vld [vmem:[%s152] sm:%s145]
                %155 = vst [vmem:[%s153] sm:%s145] %v154
                %v156 = vld [vmem:[%s152 + $0x10] sm:%s145]
                %157 = vst [vmem:[%s153 + $0x8] sm:%s145] %v156
                %v158 = vld [vmem:[%s152 + $0x20] sm:%s145]
                %159 = vst [vmem:[%s153 + $0x10] sm:%s145] %v158
                %v160 = vld [vmem:[%s152 + $0x30] sm:%s145]
                %161 = vst [vmem:[%s153 + $0x18] sm:%s145] %v160
                %v162 = vld [vmem:[%s152 + $0x40] sm:%s145]
                %163 = vst [vmem:[%s153 + $0x20] sm:%s145] %v162
                %v164 = vld [vmem:[%s152 + $0x50] sm:%s145]
                %165 = vst [vmem:[%s153 + $0x28] sm:%s145] %v164
                %v166 = vld [vmem:[%s152 + $0x60] sm:%s145]
                %167 = vst [vmem:[%s153 + $0x30] sm:%s145] %v166
                %v168 = vld [vmem:[%s152 + $0x70] sm:%s145]
                %169 = vst [vmem:[%s153 + $0x38] sm:%s145] %v168
                %v170 = vld [vmem:[%s152 + $0x80] sm:%s145]
                %171 = vst [vmem:[%s153 + $0x40] sm:%s145] %v170
                %v172 = vld [vmem:[%s152 + $0x90] sm:%s145]
                %173 = vst [vmem:[%s153 + $0x48] sm:%s145] %v172
                %v174 = vld [vmem:[%s152 + $0xa0] sm:%s145]
                %175 = vst [vmem:[%s153 + $0x50] sm:%s145] %v174
                %v176 = vld [vmem:[%s152 + $0xb0] sm:%s145]
                %177 = vst [vmem:[%s153 + $0x58] sm:%s145] %v176
                %v178 = vld [vmem:[%s152 + $0xc0] sm:%s145]
                %179 = vst [vmem:[%s153 + $0x60] sm:%s145] %v178
                %v180 = vld [vmem:[%s152 + $0xd0] sm:%s145]
                %181 = vst [vmem:[%s153 + $0x68] sm:%s145] %v180
                %v182 = vld [vmem:[%s152 + $0xe0] sm:%s145]
                %183 = vst [vmem:[%s153 + $0x70] sm:%s145] %v182
                %v184 = vld [vmem:[%s152 + $0xf0] sm:%s145]
                %185 = vst [vmem:[%s153 + $0x78] sm:%s145] %v184
              $region41: #{cbp_forward.2} parent=35 // loop_footer
                %s151 = sadd.s32 1, %s147
              $region42: #{cbp_forward.2} parent=35 // loop_footer_branch
                %146 = sbr.rel target = $region38
              $region43: #{cbp_forward.2} parent=35 // loop_exit
                _
            $region36: #{cbp_forward.2} parent=27 // pred_fallthru
              _
          $region28: #{cbp_forward.2} parent=23 // pred_fallthru
            _
          %230 = vnop
        $region24: #{cbp_forward.2} parent=19 // pred_fallthru
          _
      $region20: #{cbp_forward.2} parent=5 // pred_fallthru
        _
      %p231 = scmp.le.s32.totalorder 1, %s8
      %p232 = scmp.lt.s32.totalorder %s8, 3
      %p233 = pnand %p231, %p232
      %p234 = pneg %p233
      // Predicated region
      $region59: #{cbp_forward.2} parent=5 // pred_check
        _
      $region60: #{cbp_forward.2} parent=5 // pred_check_branch
        %236 = sbr.rel (%p233) target = $region62
      $region61: #{cbp_forward.2} parent=5 // pred_region
        %s237 = ssub.s32 %s8, 1
        %s238 = sand.u32 %s59, 1
        %s239 = sand.u32 %s59, 1
        %s240 = smul.addr %s239, 128
        %s241 = scalar_lea.vmem [#allocation2], %s240
        // Predicated region
        $region63: #{cbp_forward.2} parent=61 // pred_check
          %p242 = pneg %p72
        $region64: #{cbp_forward.2} parent=61 // pred_check_branch
          %244 = sbr.rel (%p242) target = $region66
        $region65: #{cbp_forward.2} parent=61 // pred_region
          _
        $region66: #{cbp_forward.2} parent=61 // pred_fallthru
          _
        %s245 = smul.u32 16, %s17
        %p246 = scmp.lt.s32.totalorder %s245, 15
        %s247 = scalar_select %p246, %s245, 15
        %s248 = smul.addr %s247, 4
        %s249 = scalar_lea.vmem %s0, %s248
        %p250 = pneg %p46
        %p251 = pneg %p43
        %s252 = sand.u32 %s59, 1
        %s253 = sand.u32 %s59, 1
        %s254 = smul.addr %s253, 128
        %s255 = scalar_lea.vmem [#allocation2], %s254
        %p256 = pneg %p72
        %p257 = pneg %p69
        %p258 = pneg %p100
        %p259 = pneg %p97
        %s260 = sand.u32 %s87, 1
        %s261 = sand.u32 %s87, 1
        %s262 = smul.addr %s261, 256
        %s263 = scalar_lea.vmem [#allocation3], %s262
        %s264 = smul.u32 16, %s17
        %p265 = scmp.lt.s32.totalorder %s264, 15
        %s266 = scalar_select %p265, %s264, 15
        %s267 = smul.addr %s266, 4
        %s268 = scalar_lea.vmem %s0, %s267
        %s269 = smul.u32 16, %s17
        %s270 = smul.u32 2, %s18
        %s271 = smul.u32 16, %s17
        %s272 = smul.u32 2, %s18
        %v274 = vld [vmem:[%s268] sm:$0xf]
        %v275 = vld [vmem:[%s268 + $0x4] sm:$0xf]
        %v276 = vld [vmem:[%s268 + $0x8] sm:$0xf]
        %v277 = vld [vmem:[%s268 + $0xc] sm:$0xf]
        %v278 = vld [vmem:[%s268 + $0x10] sm:$0xf]
        %v279 = vld [vmem:[%s268 + $0x14] sm:$0xf]
        %v280 = vld [vmem:[%s268 + $0x18] sm:$0xf]
        %v281 = vld [vmem:[%s268 + $0x1c] sm:$0xf]
        %v282 = vld [vmem:[%s268 + $0x20] sm:$0xf]
        %v283 = vld [vmem:[%s268 + $0x24] sm:$0xf]
        %v284 = vld [vmem:[%s268 + $0x28] sm:$0xf]
        %v285 = vld [vmem:[%s268 + $0x2c] sm:$0xf]
        %v286 = vld [vmem:[%s268 + $0x30] sm:$0xf]
        %v287 = vld [vmem:[%s268 + $0x34] sm:$0xf]
        %v288 = vld [vmem:[%s268 + $0x38] sm:$0xf]
        %v289 = vld [vmem:[%s268 + $0x3c] sm:$0xf]
        %v290 = vld [vmem:[%s241] sm:$0xff]
        %v291 = vld [vmem:[%s241 + $0x8] sm:$0xff]
        %v292 = vld [vmem:[%s241 + $0x10] sm:$0xff]
        %v293 = vld [vmem:[%s241 + $0x18] sm:$0xff]
        %v294 = vld [vmem:[%s241 + $0x20] sm:$0xff]
        %v295 = vld [vmem:[%s241 + $0x28] sm:$0xff]
        %v296 = vld [vmem:[%s241 + $0x30] sm:$0xff]
        %v297 = vld [vmem:[%s241 + $0x38] sm:$0xff]
        %v298 = vld [vmem:[%s241 + $0x40] sm:$0xff]
        %v299 = vld [vmem:[%s241 + $0x48] sm:$0xff]
        %v300 = vld [vmem:[%s241 + $0x50] sm:$0xff]
        %v301 = vld [vmem:[%s241 + $0x58] sm:$0xff]
        %v302 = vld [vmem:[%s241 + $0x60] sm:$0xff]
        %v303 = vld [vmem:[%s241 + $0x68] sm:$0xff]
        %v304 = vld [vmem:[%s241 + $0x70] sm:$0xff]
        %v305 = vld [vmem:[%s241 + $0x78] sm:$0xff]
        %v322 = vunpack.c.l.b16 %v274
        %v323 = vunpack.c.l.b16 %v275
        %v324 = vunpack.c.l.b16 %v276
        %v325 = vunpack.c.l.b16 %v277
        %v326 = vunpack.c.l.b16 %v278
        %v327 = vunpack.c.l.b16 %v279
        %v328 = vunpack.c.l.b16 %v280
        %v329 = vunpack.c.l.b16 %v281
        %v330 = vunpack.c.l.b16 %v282
        %v331 = vunpack.c.l.b16 %v283
        %v332 = vunpack.c.l.b16 %v284
        %v333 = vunpack.c.l.b16 %v285
        %v334 = vunpack.c.l.b16 %v286
        %v335 = vunpack.c.l.b16 %v287
        %v336 = vunpack.c.l.b16 %v288
        %v337 = vunpack.c.l.b16 %v289
        %v338 = vpack.c.b16 %v323, %v322
        %v339 = vpack.c.b16 %v325, %v324
        %v340 = vpack.c.b16 %v327, %v326
        %v341 = vpack.c.b16 %v329, %v328
        %v342 = vpack.c.b16 %v331, %v330
        %v343 = vpack.c.b16 %v333, %v332
        %v344 = vpack.c.b16 %v335, %v334
        %v345 = vpack.c.b16 %v337, %v336
        %v370 = vunpack.c.l.b16 %v290
        %v371 = vunpack.c.h.b16 %v290
        %v372 = vunpack.c.l.b16 %v291
        %v373 = vunpack.c.h.b16 %v291
        %v374 = vunpack.c.l.b16 %v292
        %v375 = vunpack.c.h.b16 %v292
        %v376 = vunpack.c.l.b16 %v293
        %v377 = vunpack.c.h.b16 %v293
        %v378 = vunpack.c.l.b16 %v294
        %v379 = vunpack.c.h.b16 %v294
        %v380 = vunpack.c.l.b16 %v295
        %v381 = vunpack.c.h.b16 %v295
        %v382 = vunpack.c.l.b16 %v296
        %v383 = vunpack.c.h.b16 %v296
        %v384 = vunpack.c.l.b16 %v297
        %v385 = vunpack.c.h.b16 %v297
        %v386 = vunpack.c.l.b16 %v298
        %v387 = vunpack.c.h.b16 %v298
        %v388 = vunpack.c.l.b16 %v299
        %v389 = vunpack.c.h.b16 %v299
        %v390 = vunpack.c.l.b16 %v300
        %v391 = vunpack.c.h.b16 %v300
        %v392 = vunpack.c.l.b16 %v301
        %v393 = vunpack.c.h.b16 %v301
        %v394 = vunpack.c.l.b16 %v302
        %v395 = vunpack.c.h.b16 %v302
        %v396 = vunpack.c.l.b16 %v303
        %v397 = vunpack.c.h.b16 %v303
        %v398 = vunpack.c.l.b16 %v304
        %v399 = vunpack.c.h.b16 %v304
        %v400 = vunpack.c.l.b16 %v305
        %v401 = vunpack.c.h.b16 %v305
        %v402 = vpack.c.b16 %v372, %v370
        %v403 = vpack.c.b16 %v373, %v371
        %v404 = vpack.c.b16 %v376, %v374
        %v405 = vpack.c.b16 %v377, %v375
        %v406 = vpack.c.b16 %v380, %v378
        %v407 = vpack.c.b16 %v381, %v379
        %v408 = vpack.c.b16 %v384, %v382
        %v409 = vpack.c.b16 %v385, %v383
        %v410 = vpack.c.b16 %v388, %v386
        %v411 = vpack.c.b16 %v389, %v387
        %v412 = vpack.c.b16 %v392, %v390
        %v413 = vpack.c.b16 %v393, %v391
        %v414 = vpack.c.b16 %v396, %v394
        %v415 = vpack.c.b16 %v397, %v395
        %v416 = vpack.c.b16 %v400, %v398
        %v417 = vpack.c.b16 %v401, %v399
        %434 = vmatprep.subr.bf16.mxu0 %v417
        %435 = vmatpush1.bf16.msra.mxu0 %v416
        %436 = vmatprep.subr.bf16.mxu0 %v415
        %437 = vmatpush1.bf16.msra.mxu0 %v414
        %438 = vmatprep.subr.bf16.mxu0 %v413
        %439 = vmatpush1.bf16.msra.mxu0 %v412
        %440 = vmatprep.subr.bf16.mxu0 %v411
        %441 = vmatpush1.bf16.msra.mxu0 %v410
        %442 = vmatprep.subr.bf16.mxu0 %v409
        %443 = vmatpush1.bf16.msra.mxu0 %v408
        %444 = vmatprep.subr.bf16.mxu0 %v407
        %445 = vmatpush1.bf16.msra.mxu0 %v406
        %446 = vmatprep.subr.bf16.mxu0 %v405
        %447 = vmatpush1.bf16.msra.mxu0 %v404
        %448 = vmatprep.subr.bf16.mxu0 %v403
        %449 = vmatpush1.bf16.msra.mxu0 %v402
        %450 = vmatprep.subr.bf16.mxu0 0
        %451 = vmatpush2.bf16.msra.mxu0 0
        %452 = vmatprep.subr.bf16.mxu0 0
        %453 = vmatpush2.bf16.msra.mxu0 0
        %454 = vmatprep.subr.bf16.mxu0 0
        %455 = vmatpush2.bf16.msra.mxu0 0
        %456 = vmatprep.subr.bf16.mxu0 0
        %457 = vmatpush2.bf16.msra.mxu0 0
        %458 = vmatprep.subr.bf16.mxu0 0
        %459 = vmatpush2.bf16.msra.mxu0 0
        %460 = vmatprep.subr.bf16.mxu0 0
        %461 = vmatpush2.bf16.msra.mxu0 0
        %462 = vmatprep.subr.bf16.mxu0 0
        %463 = vmatpush2.bf16.msra.mxu0 0
        %464 = vmatprep.subr.bf16.mxu0 0
        %465 = vmatpush2.bf16.msra.mxu0 0
        %466 = vmatprep.mubr.bf16.mxu0 0
        %467 = vmatmul.mubr.bf16.gmra.mxu0 %v338
        %v468 = vpop.f32.mrf.mxu0
        %v469 = vadd.f32 0.0, %v468
        %v470 = vpop.f32.mrf.mxu0
        %v471 = vadd.f32 0.0, %v470
        %v472 = vpop.f32.mrf.mxu0
        %v473 = vadd.f32 0.0, %v472
        %v474 = vpop.f32.mrf.mxu0
        %v475 = vadd.f32 0.0, %v474
        %476 = vmatprep.mubr.bf16.mxu0 0
        %477 = vmatmul.mubr.bf16.gmra.mxu0 %v339
        %v478 = vpop.f32.mrf.mxu0
        %v479 = vadd.f32 0.0, %v478
        %v480 = vpop.f32.mrf.mxu0
        %v481 = vadd.f32 0.0, %v480
        %v482 = vpop.f32.mrf.mxu0
        %v483 = vadd.f32 0.0, %v482
        %v484 = vpop.f32.mrf.mxu0
        %v485 = vadd.f32 0.0, %v484
        %486 = vmatprep.mubr.bf16.mxu0 0
        %487 = vmatmul.mubr.bf16.gmra.mxu0 %v340
        %v488 = vpop.f32.mrf.mxu0
        %v489 = vadd.f32 0.0, %v488
        %v490 = vpop.f32.mrf.mxu0
        %v491 = vadd.f32 0.0, %v490
        %v492 = vpop.f32.mrf.mxu0
        %v493 = vadd.f32 0.0, %v492
        %v494 = vpop.f32.mrf.mxu0
        %v495 = vadd.f32 0.0, %v494
        %496 = vmatprep.mubr.bf16.mxu0 0
        %497 = vmatmul.mubr.bf16.gmra.mxu0 %v341
        %v498 = vpop.f32.mrf.mxu0
        %v499 = vadd.f32 0.0, %v498
        %v500 = vpop.f32.mrf.mxu0
        %v501 = vadd.f32 0.0, %v500
        %v502 = vpop.f32.mrf.mxu0
        %v503 = vadd.f32 0.0, %v502
        %v504 = vpop.f32.mrf.mxu0
        %v505 = vadd.f32 0.0, %v504
        %506 = vmatprep.mubr.bf16.mxu0 0
        %507 = vmatmul.mubr.bf16.gmra.mxu0 %v342
        %v508 = vpop.f32.mrf.mxu0
        %v509 = vadd.f32 0.0, %v508
        %v510 = vpop.f32.mrf.mxu0
        %v511 = vadd.f32 0.0, %v510
        %v512 = vpop.f32.mrf.mxu0
        %v513 = vadd.f32 0.0, %v512
        %v514 = vpop.f32.mrf.mxu0
        %v515 = vadd.f32 0.0, %v514
        %516 = vmatprep.mubr.bf16.mxu0 0
        %517 = vmatmul.mubr.bf16.gmra.mxu0 %v343
        %v518 = vpop.f32.mrf.mxu0
        %v519 = vadd.f32 0.0, %v518
        %v520 = vpop.f32.mrf.mxu0
        %v521 = vadd.f32 0.0, %v520
        %v522 = vpop.f32.mrf.mxu0
        %v523 = vadd.f32 0.0, %v522
        %v524 = vpop.f32.mrf.mxu0
        %v525 = vadd.f32 0.0, %v524
        %526 = vmatprep.mubr.bf16.mxu0 0
        %527 = vmatmul.mubr.bf16.gmra.mxu0 %v344
        %v528 = vpop.f32.mrf.mxu0
        %v529 = vadd.f32 0.0, %v528
        %v530 = vpop.f32.mrf.mxu0
        %v531 = vadd.f32 0.0, %v530
        %v532 = vpop.f32.mrf.mxu0
        %v533 = vadd.f32 0.0, %v532
        %v534 = vpop.f32.mrf.mxu0
        %v535 = vadd.f32 0.0, %v534
        %536 = vmatprep.mubr.bf16.mxu0 0
        %537 = vmatmul.mubr.bf16.gmra.mxu0 %v345
        %v538 = vpop.f32.mrf.mxu0
        %v539 = vadd.f32 0.0, %v538
        %v540 = vpop.f32.mrf.mxu0
        %v541 = vadd.f32 0.0, %v540
        %v542 = vpop.f32.mrf.mxu0
        %v543 = vadd.f32 0.0, %v542
        %v544 = vpop.f32.mrf.mxu0
        %v545 = vadd.f32 0.0, %v544
        %546 = vdwg.mxu0
        %547 = vst [vmem:[%s263] sm:$0xff] %v469
        %548 = vst [vmem:[%s263 + $0x8] sm:$0xff] %v471
        %549 = vst [vmem:[%s263 + $0x10] sm:$0xff] %v473
        %550 = vst [vmem:[%s263 + $0x18] sm:$0xff] %v475
        %551 = vst [vmem:[%s263 + $0x20] sm:$0xff] %v479
        %552 = vst [vmem:[%s263 + $0x28] sm:$0xff] %v481
        %553 = vst [vmem:[%s263 + $0x30] sm:$0xff] %v483
        %554 = vst [vmem:[%s263 + $0x38] sm:$0xff] %v485
        %555 = vst [vmem:[%s263 + $0x40] sm:$0xff] %v489
        %556 = vst [vmem:[%s263 + $0x48] sm:$0xff] %v491
        %557 = vst [vmem:[%s263 + $0x50] sm:$0xff] %v493
        %558 = vst [vmem:[%s263 + $0x58] sm:$0xff] %v495
        %559 = vst [vmem:[%s263 + $0x60] sm:$0xff] %v499
        %560 = vst [vmem:[%s263 + $0x68] sm:$0xff] %v501
        %561 = vst [vmem:[%s263 + $0x70] sm:$0xff] %v503
        %562 = vst [vmem:[%s263 + $0x78] sm:$0xff] %v505
        %563 = vst [vmem:[%s263 + $0x80] sm:$0xff] %v509
        %564 = vst [vmem:[%s263 + $0x88] sm:$0xff] %v511
        %565 = vst [vmem:[%s263 + $0x90] sm:$0xff] %v513
        %566 = vst [vmem:[%s263 + $0x98] sm:$0xff] %v515
        %567 = vst [vmem:[%s263 + $0xa0] sm:$0xff] %v519
        %568 = vst [vmem:[%s263 + $0xa8] sm:$0xff] %v521
        %569 = vst [vmem:[%s263 + $0xb0] sm:$0xff] %v523
        %570 = vst [vmem:[%s263 + $0xb8] sm:$0xff] %v525
        %571 = vst [vmem:[%s263 + $0xc0] sm:$0xff] %v529
        %572 = vst [vmem:[%s263 + $0xc8] sm:$0xff] %v531
        %573 = vst [vmem:[%s263 + $0xd0] sm:$0xff] %v533
        %574 = vst [vmem:[%s263 + $0xd8] sm:$0xff] %v535
        %575 = vst [vmem:[%s263 + $0xe0] sm:$0xff] %v539
        %576 = vst [vmem:[%s263 + $0xe8] sm:$0xff] %v541
        %577 = vst [vmem:[%s263 + $0xf0] sm:$0xff] %v543
        %578 = vst [vmem:[%s263 + $0xf8] sm:$0xff] %v545
        %s579 = sand.u32 %s87, 1
        %s580 = sand.u32 %s87, 1
        %s581 = smul.addr %s580, 256
        %s582 = scalar_lea.vmem [#allocation3], %s581
        // Predicated region
        $region67: #{cbp_forward.2} parent=61 // pred_check
          %p583 = pneg %p97
        $region68: #{cbp_forward.2} parent=61 // pred_check_branch
          %585 = sbr.rel (%p583) target = $region70
        $region69: #{cbp_forward.2} parent=61 // pred_region
          %s586 = smul.u32 16, %s17
          %s587 = smul.u32 2, %s18
          %s588 = smul.addr %s586, 4
          %s589 = sadd.s32 %s587, %s588
          %s590 = smul.addr %s589, 8
          %s591 = scalar_lea.vmem %s2, %s590
          // Predicated region
          $region71: #{cbp_forward.2} parent=69 // pred_check
            _
          $region72: #{cbp_forward.2} parent=69 // pred_check_branch
            %593 = sbr.rel (0) target = $region74
          $region73: #{cbp_forward.2} parent=69 // pred_region
            // Predicated region
            $region75: #{cbp_forward.2} parent=73 // pred_check
              _
            $region76: #{cbp_forward.2} parent=73 // pred_check_branch
              %595 = sbr.rel (0) target = $region78
            $region77: #{cbp_forward.2} parent=73 // pred_region
              loop: start=0, step=1, limit=1
              $region79: #{cbp_forward.2} parent=77 // loop_pre_header
                _
              $region80: #{cbp_forward.2} parent=77 // loop_header
                %s597 = sphi 0, %s601
                %p598 = scmp.ge.s32.totalorder %s597, 1
                %s602 = sphi %s582, %s582
                %s603 = sphi %s591, %s591
              $region81: #{cbp_forward.2} parent=77 // loop_header_branch
                %600 = sbr.rel (%p598) target = $region85
              $region82: #{cbp_forward.2} parent=77 // loop_body
                %v604 = vld [vmem:[%s602] sm:$0xff]
                %605 = vst [vmem:[%s603] sm:$0xff] %v604
                %v606 = vld [vmem:[%s602 + $0x8] sm:$0xff]
                %607 = vst [vmem:[%s603 + $0x8] sm:$0xff] %v606
                %v608 = vld [vmem:[%s602 + $0x10] sm:$0xff]
                %609 = vst [vmem:[%s603 + $0x20] sm:$0xff] %v608
                %v610 = vld [vmem:[%s602 + $0x18] sm:$0xff]
                %611 = vst [vmem:[%s603 + $0x28] sm:$0xff] %v610
                %v612 = vld [vmem:[%s602 + $0x20] sm:$0xff]
                %613 = vst [vmem:[%s603 + $0x40] sm:$0xff] %v612
                %v614 = vld [vmem:[%s602 + $0x28] sm:$0xff]
                %615 = vst [vmem:[%s603 + $0x48] sm:$0xff] %v614
                %v616 = vld [vmem:[%s602 + $0x30] sm:$0xff]
                %617 = vst [vmem:[%s603 + $0x60] sm:$0xff] %v616
                %v618 = vld [vmem:[%s602 + $0x38] sm:$0xff]
                %619 = vst [vmem:[%s603 + $0x68] sm:$0xff] %v618
                %v620 = vld [vmem:[%s602 + $0x40] sm:$0xff]
                %621 = vst [vmem:[%s603 + $0x80] sm:$0xff] %v620
                %v622 = vld [vmem:[%s602 + $0x48] sm:$0xff]
                %623 = vst [vmem:[%s603 + $0x88] sm:$0xff] %v622
                %v624 = vld [vmem:[%s602 + $0x50] sm:$0xff]
                %625 = vst [vmem:[%s603 + $0xa0] sm:$0xff] %v624
                %v626 = vld [vmem:[%s602 + $0x58] sm:$0xff]
                %627 = vst [vmem:[%s603 + $0xa8] sm:$0xff] %v626
                %v628 = vld [vmem:[%s602 + $0x60] sm:$0xff]
                %629 = vst [vmem:[%s603 + $0xc0] sm:$0xff] %v628
                %v630 = vld [vmem:[%s602 + $0x68] sm:$0xff]
                %631 = vst [vmem:[%s603 + $0xc8] sm:$0xff] %v630
                %v632 = vld [vmem:[%s602 + $0x70] sm:$0xff]
                %633 = vst [vmem:[%s603 + $0xe0] sm:$0xff] %v632
                %v634 = vld [vmem:[%s602 + $0x78] sm:$0xff]
                %635 = vst [vmem:[%s603 + $0xe8] sm:$0xff] %v634
                %v636 = vld [vmem:[%s602 + $0x80] sm:$0xff]
                %637 = vst [vmem:[%s603 + $0x100] sm:$0xff] %v636
                %v638 = vld [vmem:[%s602 + $0x88] sm:$0xff]
                %639 = vst [vmem:[%s603 + $0x108] sm:$0xff] %v638
                %v640 = vld [vmem:[%s602 + $0x90] sm:$0xff]
                %641 = vst [vmem:[%s603 + $0x120] sm:$0xff] %v640
                %v642 = vld [vmem:[%s602 + $0x98] sm:$0xff]
                %643 = vst [vmem:[%s603 + $0x128] sm:$0xff] %v642
                %v644 = vld [vmem:[%s602 + $0xa0] sm:$0xff]
                %645 = vst [vmem:[%s603 + $0x140] sm:$0xff] %v644
                %v646 = vld [vmem:[%s602 + $0xa8] sm:$0xff]
                %647 = vst [vmem:[%s603 + $0x148] sm:$0xff] %v646
                %v648 = vld [vmem:[%s602 + $0xb0] sm:$0xff]
                %649 = vst [vmem:[%s603 + $0x160] sm:$0xff] %v648
                %v650 = vld [vmem:[%s602 + $0xb8] sm:$0xff]
                %651 = vst [vmem:[%s603 + $0x168] sm:$0xff] %v650
                %v652 = vld [vmem:[%s602 + $0xc0] sm:$0xff]
                %653 = vst [vmem:[%s603 + $0x180] sm:$0xff] %v652
                %v654 = vld [vmem:[%s602 + $0xc8] sm:$0xff]
                %655 = vst [vmem:[%s603 + $0x188] sm:$0xff] %v654
                %v656 = vld [vmem:[%s602 + $0xd0] sm:$0xff]
                %657 = vst [vmem:[%s603 + $0x1a0] sm:$0xff] %v656
                %v658 = vld [vmem:[%s602 + $0xd8] sm:$0xff]
                %659 = vst [vmem:[%s603 + $0x1a8] sm:$0xff] %v658
                %v660 = vld [vmem:[%s602 + $0xe0] sm:$0xff]
                %661 = vst [vmem:[%s603 + $0x1c0] sm:$0xff] %v660
                %v662 = vld [vmem:[%s602 + $0xe8] sm:$0xff]
                %663 = vst [vmem:[%s603 + $0x1c8] sm:$0xff] %v662
                %v664 = vld [vmem:[%s602 + $0xf0] sm:$0xff]
                %665 = vst [vmem:[%s603 + $0x1e0] sm:$0xff] %v664
                %v666 = vld [vmem:[%s602 + $0xf8] sm:$0xff]
                %667 = vst [vmem:[%s603 + $0x1e8] sm:$0xff] %v666
              $region83: #{cbp_forward.2} parent=77 // loop_footer
                %s601 = sadd.s32 1, %s597
              $region84: #{cbp_forward.2} parent=77 // loop_footer_branch
                %596 = sbr.rel target = $region80
              $region85: #{cbp_forward.2} parent=77 // loop_exit
                _
            $region78: #{cbp_forward.2} parent=73 // pred_fallthru
              _
            // Predicated region
            $region86: #{cbp_forward.2} parent=73 // pred_check
              _
            $region87: #{cbp_forward.2} parent=73 // pred_check_branch
              %669 = sbr.rel target = $region89
            $region88: #{cbp_forward.2} parent=73 // pred_region
              _
            $region89: #{cbp_forward.2} parent=73 // pred_fallthru
              _
          $region74: #{cbp_forward.2} parent=69 // pred_fallthru
            _
          %670 = vnop
        $region70: #{cbp_forward.2} parent=61 // pred_fallthru
          _
      $region62: #{cbp_forward.2} parent=5 // pred_fallthru
        _
      %p671 = scmp.le.s32.totalorder 2, %s8
      // Predicated region
      $region90: #{cbp_forward.2} parent=5 // pred_check
        %p672 = pneg %p671
      $region91: #{cbp_forward.2} parent=5 // pred_check_branch
        %674 = sbr.rel (%p672) target = $region93
      $region92: #{cbp_forward.2} parent=5 // pred_region
        %s675 = ssub.s32 %s8, 2
        // Predicated region
        $region94: #{cbp_forward.2} parent=92 // pred_check
          %p676 = pneg %p103
        $region95: #{cbp_forward.2} parent=92 // pred_check_branch
          %678 = sbr.rel (%p676) target = $region97
        $region96: #{cbp_forward.2} parent=92 // pred_region
          %s679 = sand.u32 %s88, 1
          %s680 = sand.u32 %s88, 1
          %s681 = smul.addr %s680, 256
          %s682 = scalar_lea.vmem [#allocation3], %s681
        $region97: #{cbp_forward.2} parent=92 // pred_fallthru
          _
      $region93: #{cbp_forward.2} parent=5 // pred_fallthru
        _
    $region6: #{cbp_forward.2} parent=1 // loop_footer
      %s12 = sadd.s32 1, %s8
    $region7: #{cbp_forward.2} parent=1 // loop_footer_branch
      %7 = sbr.rel target = $region3
    $region8: #{cbp_forward.2} parent=1 // loop_exit
      _

// kernel: reverse.1
$region0: #{reverse.1}
  %s0 = inlined_call_operand.vmem [shape: f32[2,127], index: 0, kind: input, shape index: {}]
  %s1 = inlined_call_operand.vmem [shape: f32[2,127], index: 1, kind: output, shape index: {}]
  %v2 = vlaneseq
  %v3 = vsub.s32 126, %v2
  %4 = vset.pattern.permute.xlu0 %v3
  $region1: #{reverse.1} parent=0
    #allocation0 [shape = 'u8[4096]{0}', space=vmem, size = 0x1000, scoped, tag = 'operand span for operand 0']
    #allocation1 [shape = 'u8[1024]{0}', space=vmem, size = 0x400, scoped, tag = 'packed  for operand 0']
    #allocation2 [shape = 'u8[4096]{0}', space=vmem, size = 0x1000, scoped, tag = 'operand span for operand 1']
    #allocation3 [shape = 'u8[1024]{0}', space=vmem, size = 0x400, scoped, tag = 'packed  for operand 1']
    // Predicated region
    $region2: #{reverse.1} parent=1 // pred_check
      _
    $region3: #{reverse.1} parent=1 // pred_check_branch
      %6 = sbr.rel (0) target = $region5
    $region4: #{reverse.1} parent=1 // pred_region
      // Predicated region
      $region6: #{reverse.1} parent=4 // pred_check
        _
      $region7: #{reverse.1} parent=4 // pred_check_branch
        %8 = sbr.rel target = $region9
      $region8: #{reverse.1} parent=4 // pred_region
        // Predicated region
        $region21: #{reverse.1} parent=8 // pred_check
          _
        $region22: #{reverse.1} parent=8 // pred_check_branch
          %24 = sbr.rel (0) target = $region24
        $region23: #{reverse.1} parent=8 // pred_region
          %s26 = ssub.s32 4, 1
          loop: start=0, step=1, limit=1
          $region25: #{reverse.1} parent=23 // loop_pre_header
            _
          $region26: #{reverse.1} parent=23 // loop_header
            %s28 = sphi 0, %s32
            %p29 = scmp.ge.s32.totalorder %s28, 1
            %s33 = sphi %s0, %s0
            %s34 = sphi [#allocation1], [#allocation1]
          $region27: #{reverse.1} parent=23 // loop_header_branch
            %31 = sbr.rel (%p29) target = $region31
          $region28: #{reverse.1} parent=23 // loop_body
            %v35 = vld [vmem:[%s33] sm:%s26]
            %36 = vst [vmem:[%s34] sm:%s26] %v35
          $region29: #{reverse.1} parent=23 // loop_footer
            %s32 = sadd.s32 1, %s28
          $region30: #{reverse.1} parent=23 // loop_footer_branch
            %27 = sbr.rel target = $region26
          $region31: #{reverse.1} parent=23 // loop_exit
            _
        $region24: #{reverse.1} parent=8 // pred_fallthru
          _
      $region9: #{reverse.1} parent=4 // pred_fallthru
        _
      // Predicated region
      $region10: #{reverse.1} parent=4 // pred_check
        _
      $region11: #{reverse.1} parent=4 // pred_check_branch
        %10 = sbr.rel (0) target = $region13
      $region12: #{reverse.1} parent=4 // pred_region
        %s12 = ssub.s32 4, 1
        loop: start=0, step=1, limit=1
        $region14: #{reverse.1} parent=12 // loop_pre_header
          _
        $region15: #{reverse.1} parent=12 // loop_header
          %s14 = sphi 0, %s18
          %p15 = scmp.ge.s32.totalorder %s14, 1
          %s19 = sphi %s0, %s0
          %s20 = sphi [#allocation1], [#allocation1]
        $region16: #{reverse.1} parent=12 // loop_header_branch
          %17 = sbr.rel (%p15) target = $region20
        $region17: #{reverse.1} parent=12 // loop_body
          %v21 = vld [vmem:[%s19] sm:%s12]
          %22 = vst [vmem:[%s20] sm:%s12] %v21
        $region18: #{reverse.1} parent=12 // loop_footer
          %s18 = sadd.s32 1, %s14
        $region19: #{reverse.1} parent=12 // loop_footer_branch
          %13 = sbr.rel target = $region15
        $region20: #{reverse.1} parent=12 // loop_exit
          _
      $region13: #{reverse.1} parent=4 // pred_fallthru
        _
    $region5: #{reverse.1} parent=1 // pred_fallthru
      _
    %37 = vnop
    %s39 = sshll.u32 1, 2
    %s40 = ssub.s32 %s39, 1
    %v41 = vld [vmem:[#allocation1] sm:%s40]
    %42 = vst [vmem:[#allocation0] sm:%s40] %v41
    %v43 = vld [vmem:[#allocation0] sm:$0xff]
    %44 = vperm.xlu0 %4, %v43
    %v45 = vpop.permute.xlu0 %44
    %46 = vst [vmem:[#allocation2] sm:$0xff] %v45
    %s48 = sshll.u32 1, 2
    %s49 = ssub.s32 %s48, 1
    %v51 = vld [vmem:[#allocation2] sm:%s49]
    %s52 = sshll.u32 1, 2
    %s53 = ssub.s32 %s52, 1
    %54 = vst [vmem:[#allocation3] sm:%s53] %v51
    // Predicated region
    $region32: #{reverse.1} parent=1 // pred_check
      _
    $region33: #{reverse.1} parent=1 // pred_check_branch
      %56 = sbr.rel (0) target = $region35
    $region34: #{reverse.1} parent=1 // pred_region
      // Predicated region
      $region36: #{reverse.1} parent=34 // pred_check
        _
      $region37: #{reverse.1} parent=34 // pred_check_branch
        %58 = sbr.rel target = $region39
      $region38: #{reverse.1} parent=34 // pred_region
        // Predicated region
        $region51: #{reverse.1} parent=38 // pred_check
          _
        $region52: #{reverse.1} parent=38 // pred_check_branch
          %74 = sbr.rel (0) target = $region54
        $region53: #{reverse.1} parent=38 // pred_region
          %s76 = ssub.s32 4, 1
          loop: start=0, step=1, limit=1
          $region55: #{reverse.1} parent=53 // loop_pre_header
            _
          $region56: #{reverse.1} parent=53 // loop_header
            %s78 = sphi 0, %s82
            %p79 = scmp.ge.s32.totalorder %s78, 1
            %s83 = sphi [#allocation3], [#allocation3]
            %s84 = sphi %s1, %s1
          $region57: #{reverse.1} parent=53 // loop_header_branch
            %81 = sbr.rel (%p79) target = $region61
          $region58: #{reverse.1} parent=53 // loop_body
            %v85 = vld [vmem:[%s83] sm:%s76]
            %86 = vst [vmem:[%s84] sm:%s76] %v85
          $region59: #{reverse.1} parent=53 // loop_footer
            %s82 = sadd.s32 1, %s78
          $region60: #{reverse.1} parent=53 // loop_footer_branch
            %77 = sbr.rel target = $region56
          $region61: #{reverse.1} parent=53 // loop_exit
            _
        $region54: #{reverse.1} parent=38 // pred_fallthru
          _
      $region39: #{reverse.1} parent=34 // pred_fallthru
        _
      // Predicated region
      $region40: #{reverse.1} parent=34 // pred_check
        _
      $region41: #{reverse.1} parent=34 // pred_check_branch
        %60 = sbr.rel (0) target = $region43
      $region42: #{reverse.1} parent=34 // pred_region
        %s62 = ssub.s32 4, 1
        loop: start=0, step=1, limit=1
        $region44: #{reverse.1} parent=42 // loop_pre_header
          _
        $region45: #{reverse.1} parent=42 // loop_header
          %s64 = sphi 0, %s68
          %p65 = scmp.ge.s32.totalorder %s64, 1
          %s69 = sphi [#allocation3], [#allocation3]
          %s70 = sphi %s1, %s1
        $region46: #{reverse.1} parent=42 // loop_header_branch
          %67 = sbr.rel (%p65) target = $region50
        $region47: #{reverse.1} parent=42 // loop_body
          %v71 = vld [vmem:[%s69] sm:%s62]
          %72 = vst [vmem:[%s70] sm:%s62] %v71
        $region48: #{reverse.1} parent=42 // loop_footer
          %s68 = sadd.s32 1, %s64
        $region49: #{reverse.1} parent=42 // loop_footer_branch
          %63 = sbr.rel target = $region45
        $region50: #{reverse.1} parent=42 // loop_exit
          _
      $region43: #{reverse.1} parent=34 // pred_fallthru
        _
    $region35: #{reverse.1} parent=1 // pred_fallthru
      _
    %87 = vnop

// kernel: cbp_forward.3
$region0: #{cbp_forward.3}
  #allocation0 [shape = 'u32[]', space=smem, size = 0x4, offset = 0x4, fixed_abs, tag = 'smem constant byte address 0x4 - core index']
  #allocation1 [shape = 'u32[144,128]{1,0:T(1,128)}', space=vmem, size = 0x12000, scoped, tag = 'internal scratch']
  #allocation2 [shape = 'f32[2,64,128]{2,1,0:T(8,128)}', space=vmem, size = 0x10000, scoped, tag = 'scratch operand']
  %s0 = inlined_call_operand.vmem [shape: f32[2,2,64,128], index: 0, kind: input, shape index: {}]
  %s1 = inlined_call_operand.vmem [shape: f32[2,2,64,128], index: 1, kind: input, shape index: {}]
  %s2 = inlined_call_operand.vmem [shape: f32[2,2,1,128], index: 2, kind: output, shape index: {}]
  %s3 = sld [smem:[#allocation0]]
  $region49: #{cbp_forward.3} parent=0
    _
  %s5 = ssub.s32 1, %s3
  %s6 = scalar_select 0, %s5, %s3
  loop: start=0, step=1, limit=4
  $region2: #{cbp_forward.3} parent=0 // loop_pre_header
    _
  $region3: #{cbp_forward.3} parent=0 // loop_header
    %s8 = sphi 0, %s12
    %p9 = scmp.ge.s32.totalorder %s8, 4
    %s15 = sphi 0, %s34
    %s16 = sphi 0, %s30
    %s17 = sphi 0, %s26
    %s18 = sphi 0, %s15
    %s19 = sphi 0, %s16
    %s20 = sphi 0, %s17
    %s21 = sphi 0, %s18
    %s22 = sphi 0, %s19
    %s23 = sphi 0, %s20
    %s41 = sphi 0, %s43
    %s44 = sphi 0, %s41
    %s45 = sphi 0, %s44
    %s61 = sphi 0, %s45
    %s71 = sphi 0, %s73
    %s74 = sphi 0, %s71
    %s75 = sphi 0, %s74
    %s91 = sphi 0, %s75
    %s99 = sphi 0, %s101
    %s102 = sphi 0, %s99
    %s103 = sphi 0, %s102
    %s119 = sphi 0, %s103
  $region4: #{cbp_forward.3} parent=0 // loop_header_branch
    %11 = sbr.rel (%p9) target = $region8
  $region5: #{cbp_forward.3} parent=0 // loop_body
    %s13 = ssub.s32 %s8, 1
    %s14 = ssub.s32 %s8, 2
    %s24 = sadd.s32 1, %s17
    %p25 = scmp.ge.s32.totalorder %s24, 1
    %s26 = scalar_select %p25, 0, %s24
    %s27 = sadd.s32 1, %s16
    %s28 = scalar_select %p25, %s27, %s16
    %p29 = scmp.ge.s32.totalorder %s28, 1
    %s30 = scalar_select %p29, 0, %s28
    %s31 = sadd.s32 1, %s15
    %s32 = scalar_select %p29, %s31, %s15
    %p33 = scmp.ge.s32.totalorder %s32, 2
    %s34 = scalar_select %p33, 0, %s32
    %s35 = ssub.s32 %s15, %s34
    %s36 = ssub.s32 %s17, %s26
    %s37 = sor.u32 %s35, %s36
    %s38 = ssub.s32 %s16, %s30
    %s39 = sor.u32 %s37, %s38
    %p40 = scmp.eq.s32.totalorder %s39, 0
    %s42 = sadd.s32 %s41, 1
    %s43 = scalar_select %p40, %s41, %s42
    %p46 = pneg %p40
    %p47 = scmp.eq.s32.totalorder %s8, 1
    %p48 = por %p46, %p47
    %p49 = scmp.ne.s32.totalorder %s41, %s44
    %p50 = scmp.eq.s32.totalorder %s8, 0
    %p51 = por %p49, %p50
    %p52 = scmp.ne.s32.totalorder %s41, %s44
    %p53 = scmp.eq.s32.totalorder %s13, 1
    %p54 = por %p52, %p53
    %p55 = scmp.ne.s32.totalorder %s44, %s45
    %p56 = scmp.eq.s32.totalorder %s13, 0
    %p57 = por %p55, %p56
    %p58 = scmp.ne.s32.totalorder %s44, %s45
    %p59 = scmp.eq.s32.totalorder %s14, 1
    %p60 = por %p58, %p59
    %p62 = scmp.ne.s32.totalorder %s45, %s61
    %p63 = scmp.eq.s32.totalorder %s14, 0
    %p64 = por %p62, %p63
    %s65 = ssub.s32 %s15, %s34
    %s66 = ssub.s32 %s17, %s26
    %s67 = sor.u32 %s65, %s66
    %s68 = ssub.s32 %s16, %s30
    %s69 = sor.u32 %s67, %s68
    %p70 = scmp.eq.s32.totalorder %s69, 0
    %s72 = sadd.s32 %s71, 1
    %s73 = scalar_select %p70, %s71, %s72
    %p76 = pneg %p70
    %p77 = scmp.eq.s32.totalorder %s8, 1
    %p78 = por %p76, %p77
    %p79 = scmp.ne.s32.totalorder %s71, %s74
    %p80 = scmp.eq.s32.totalorder %s8, 0
    %p81 = por %p79, %p80
    %p82 = scmp.ne.s32.totalorder %s71, %s74
    %p83 = scmp.eq.s32.totalorder %s13, 1
    %p84 = por %p82, %p83
    %p85 = scmp.ne.s32.totalorder %s74, %s75
    %p86 = scmp.eq.s32.totalorder %s13, 0
    %p87 = por %p85, %p86
    %p88 = scmp.ne.s32.totalorder %s74, %s75
    %p89 = scmp.eq.s32.totalorder %s14, 1
    %p90 = por %p88, %p89
    %p92 = scmp.ne.s32.totalorder %s75, %s91
    %p93 = scmp.eq.s32.totalorder %s14, 0
    %p94 = por %p92, %p93
    %s95 = ssub.s32 %s15, %s34
    %s96 = ssub.s32 %s16, %s30
    %s97 = sor.u32 %s95, %s96
    %p98 = scmp.eq.s32.totalorder %s97, 0
    %s100 = sadd.s32 %s99, 1
    %s101 = scalar_select %p98, %s99, %s100
    %p104 = pneg %p98
    %p105 = scmp.eq.s32.totalorder %s8, 1
    %p106 = por %p104, %p105
    %p107 = scmp.ne.s32.totalorder %s99, %s102
    %p108 = scmp.eq.s32.totalorder %s8, 0
    %p109 = por %p107, %p108
    %p110 = scmp.ne.s32.totalorder %s99, %s102
    %p111 = scmp.eq.s32.totalorder %s13, 1
    %p112 = por %p110, %p111
    %p113 = scmp.ne.s32.totalorder %s102, %s103
    %p114 = scmp.eq.s32.totalorder %s13, 0
    %p115 = por %p113, %p114
    %p116 = scmp.ne.s32.totalorder %s102, %s103
    %p117 = scmp.eq.s32.totalorder %s14, 1
    %p118 = por %p116, %p117
    %p120 = scmp.ne.s32.totalorder %s103, %s119
    %p121 = scmp.eq.s32.totalorder %s14, 0
    %p122 = por %p120, %p121
    %p123 = scmp.le.s32.totalorder 1, %s8
    %p124 = scmp.lt.s32.totalorder %s8, 3
    %p125 = pnand %p123, %p124
    %p126 = pneg %p125
    // Predicated region
    $region9: #{cbp_forward.3} parent=5 // pred_check
      _
    $region10: #{cbp_forward.3} parent=5 // pred_check_branch
      %128 = sbr.rel (%p125) target = $region12
    $region11: #{cbp_forward.3} parent=5 // pred_region
      %s129 = ssub.s32 %s8, 1
    $region12: #{cbp_forward.3} parent=5 // pred_fallthru
      _
    %p130 = scmp.lt.s32.totalorder %s8, 2
    // Predicated region
    $region13: #{cbp_forward.3} parent=5 // pred_check
      %p131 = pneg %p130
    $region14: #{cbp_forward.3} parent=5 // pred_check_branch
      %133 = sbr.rel (%p131) target = $region16
    $region15: #{cbp_forward.3} parent=5 // pred_region
      // Predicated region
      $region17: #{cbp_forward.3} parent=15 // pred_check
        %p134 = pneg %p51
      $region18: #{cbp_forward.3} parent=15 // pred_check_branch
        %136 = sbr.rel (%p134) target = $region20
      $region19: #{cbp_forward.3} parent=15 // pred_region
        %s137 = smul.u32 8, %s17
        %p138 = scmp.lt.s32.totalorder %s15, 1
        %s139 = scalar_select %p138, %s15, 1
        %p140 = scmp.lt.s32.totalorder %s137, 7
        %s141 = scalar_select %p140, %s137, 7
        %p142 = scmp.lt.s32.totalorder %s16, 0
        %s143 = scalar_select %p142, %s16, 0
        %s144 = sadd.s32 %s143, %s141
        %s145 = smul.addr %s139, 16
        %s146 = sadd.s32 %s144, %s145
        %s147 = smul.addr %s146, 8
        %s148 = scalar_lea.vmem %s0, %s147
        %s149 = smul.u32 8, %s17
      $region20: #{cbp_forward.3} parent=15 // pred_fallthru
        _
      // Predicated region
      $region21: #{cbp_forward.3} parent=15 // pred_check
        %p150 = pneg %p81
      $region22: #{cbp_forward.3} parent=15 // pred_check_branch
        %152 = sbr.rel (%p150) target = $region24
      $region23: #{cbp_forward.3} parent=15 // pred_region
        %s153 = smul.u32 8, %s17
        %p154 = scmp.lt.s32.totalorder %s15, 1
        %s155 = scalar_select %p154, %s15, 1
        %p156 = scmp.lt.s32.totalorder %s153, 7
        %s157 = scalar_select %p156, %s153, 7
        %p158 = scmp.lt.s32.totalorder %s16, 0
        %s159 = scalar_select %p158, %s16, 0
        %s160 = sadd.s32 %s159, %s157
        %s161 = smul.addr %s155, 16
        %s162 = sadd.s32 %s160, %s161
        %s163 = smul.addr %s162, 8
        %s164 = scalar_lea.vmem %s1, %s163
        %s165 = smul.u32 8, %s17
      $region24: #{cbp_forward.3} parent=15 // pred_fallthru
        _
    $region16: #{cbp_forward.3} parent=5 // pred_fallthru
      _
    %p166 = scmp.le.s32.totalorder 1, %s8
    %p167 = scmp.lt.s32.totalorder %s8, 3
    %p168 = pnand %p166, %p167
    %p169 = pneg %p168
    // Predicated region
    $region25: #{cbp_forward.3} parent=5 // pred_check
      _
    $region26: #{cbp_forward.3} parent=5 // pred_check_branch
      %171 = sbr.rel (%p168) target = $region28
    $region27: #{cbp_forward.3} parent=5 // pred_region
      %s172 = ssub.s32 %s8, 1
      %s173 = smul.u32 8, %s20
      %p174 = scmp.lt.s32.totalorder %s18, 1
      %s175 = scalar_select %p174, %s18, 1
      %p176 = scmp.lt.s32.totalorder %s173, 7
      %s177 = scalar_select %p176, %s173, 7
      %p178 = scmp.lt.s32.totalorder %s19, 0
      %s179 = scalar_select %p178, %s19, 0
      %s180 = sadd.s32 %s179, %s177
      %s181 = smul.addr %s175, 16
      %s182 = sadd.s32 %s180, %s181
      %s183 = smul.addr %s182, 8
      %s184 = scalar_lea.vmem %s0, %s183
      %p185 = pneg %p57
      %p186 = pneg %p54
      %s187 = smul.u32 8, %s20
      %p188 = scmp.lt.s32.totalorder %s18, 1
      %s189 = scalar_select %p188, %s18, 1
      %p190 = scmp.lt.s32.totalorder %s187, 7
      %s191 = scalar_select %p190, %s187, 7
      %p192 = scmp.lt.s32.totalorder %s19, 0
      %s193 = scalar_select %p192, %s19, 0
      %s194 = sadd.s32 %s193, %s191
      %s195 = smul.addr %s189, 16
      %s196 = sadd.s32 %s194, %s195
      %s197 = smul.addr %s196, 8
      %s198 = scalar_lea.vmem %s1, %s197
      %p199 = pneg %p87
      %p200 = pneg %p84
      %p201 = pneg %p115
      %p202 = pneg %p112
      %p203 = scmp.lt.s32.totalorder %s18, 1
      %s204 = scalar_select %p203, %s18, 1
      %p205 = scmp.lt.s32.totalorder %s19, 0
      %s206 = scalar_select %p205, %s19, 0
      %s207 = smul.addr %s204, 2
      %s208 = sadd.s32 %s206, %s207
      %s209 = scalar_lea.vmem %s2, %s208
      %s210 = smul.u32 8, %s20
      %p211 = scmp.lt.s32.totalorder %s18, 1
      %s212 = scalar_select %p211, %s18, 1
      %p213 = scmp.lt.s32.totalorder %s210, 7
      %s214 = scalar_select %p213, %s210, 7
      %p215 = scmp.lt.s32.totalorder %s19, 0
      %s216 = scalar_select %p215, %s19, 0
      %s217 = sadd.s32 %s216, %s214
      %s218 = smul.addr %s212, 16
      %s219 = sadd.s32 %s217, %s218
      %s220 = smul.addr %s219, 8
      %s221 = scalar_lea.vmem %s0, %s220
      %s222 = smul.u32 8, %s20
      %s223 = smul.u32 8, %s20
      %p224 = scmp.lt.s32.totalorder %s18, 1
      %s225 = scalar_select %p224, %s18, 1
      %p226 = scmp.lt.s32.totalorder %s223, 7
      %s227 = scalar_select %p226, %s223, 7
      %p228 = scmp.lt.s32.totalorder %s19, 0
      %s229 = scalar_select %p228, %s19, 0
      %s230 = sadd.s32 %s229, %s227
      %s231 = smul.addr %s225, 16
      %s232 = sadd.s32 %s230, %s231
      %s233 = smul.addr %s232, 8
      %s234 = scalar_lea.vmem %s1, %s233
      %s235 = smul.u32 8, %s20
      %p236 = scmp.lt.s32.totalorder %s18, 1
      %s237 = scalar_select %p236, %s18, 1
      %p238 = scmp.lt.s32.totalorder %s19, 0
      %s239 = scalar_select %p238, %s19, 0
      %s240 = smul.addr %s237, 2
      %s241 = sadd.s32 %s239, %s240
      %s242 = scalar_lea.vmem %s2, %s241
      %p243 = scmp.eq.s32.totalorder %s20, 0
      // Predicated region
      $region29: #{cbp_forward.3} parent=27 // pred_check
        %p244 = pneg %p243
      $region30: #{cbp_forward.3} parent=27 // pred_check_branch
        %246 = sbr.rel (%p244) target = $region32
      $region31: #{cbp_forward.3} parent=27 // pred_region
        %247 = vst [vmem:[#allocation2] sm:$0xff] 0.0
        %248 = vst [vmem:[#allocation2 + $0x8] sm:$0xff] 0.0
        %249 = vst [vmem:[#allocation2 + $0x10] sm:$0xff] 0.0
        %250 = vst [vmem:[#allocation2 + $0x18] sm:$0xff] 0.0
        %251 = vst [vmem:[#allocation2 + $0x20] sm:$0xff] 0.0
        %252 = vst [vmem:[#allocation2 + $0x28] sm:$0xff] 0.0
        %253 = vst [vmem:[#allocation2 + $0x30] sm:$0xff] 0.0
        %254 = vst [vmem:[#allocation2 + $0x38] sm:$0xff] 0.0
        %255 = vst [vmem:[#allocation2 + $0x40] sm:$0xff] 0.0
        %256 = vst [vmem:[#allocation2 + $0x48] sm:$0xff] 0.0
        %257 = vst [vmem:[#allocation2 + $0x50] sm:$0xff] 0.0
        %258 = vst [vmem:[#allocation2 + $0x58] sm:$0xff] 0.0
        %259 = vst [vmem:[#allocation2 + $0x60] sm:$0xff] 0.0
        %260 = vst [vmem:[#allocation2 + $0x68] sm:$0xff] 0.0
        %261 = vst [vmem:[#allocation2 + $0x70] sm:$0xff] 0.0
        %262 = vst [vmem:[#allocation2 + $0x78] sm:$0xff] 0.0
      $region32: #{cbp_forward.3} parent=27 // pred_fallthru
        _
      %v263 = vld [vmem:[%s221] sm:$0xff]
      %v264 = vld [vmem:[%s221 + $0x8] sm:$0xff]
      %v265 = vld [vmem:[%s221 + $0x10] sm:$0xff]
      %v266 = vld [vmem:[%s221 + $0x18] sm:$0xff]
      %v267 = vld [vmem:[%s221 + $0x20] sm:$0xff]
      %v268 = vld [vmem:[%s221 + $0x28] sm:$0xff]
      %v269 = vld [vmem:[%s221 + $0x30] sm:$0xff]
      %v270 = vld [vmem:[%s221 + $0x38] sm:$0xff]
      %v271 = vld [vmem:[%s221 + $0x40] sm:$0xff]
      %v272 = vld [vmem:[%s221 + $0x48] sm:$0xff]
      %v273 = vld [vmem:[%s221 + $0x50] sm:$0xff]
      %v274 = vld [vmem:[%s221 + $0x58] sm:$0xff]
      %v275 = vld [vmem:[%s221 + $0x60] sm:$0xff]
      %v276 = vld [vmem:[%s221 + $0x68] sm:$0xff]
      %v277 = vld [vmem:[%s221 + $0x70] sm:$0xff]
      %v278 = vld [vmem:[%s221 + $0x78] sm:$0xff]
      %v279 = vld [vmem:[%s234] sm:$0xff]
      %v280 = vld [vmem:[%s234 + $0x8] sm:$0xff]
      %v281 = vld [vmem:[%s234 + $0x10] sm:$0xff]
      %v282 = vld [vmem:[%s234 + $0x18] sm:$0xff]
      %v283 = vld [vmem:[%s234 + $0x20] sm:$0xff]
      %v284 = vld [vmem:[%s234 + $0x28] sm:$0xff]
      %v285 = vld [vmem:[%s234 + $0x30] sm:$0xff]
      %v286 = vld [vmem:[%s234 + $0x38] sm:$0xff]
      %v287 = vld [vmem:[%s234 + $0x40] sm:$0xff]
      %v288 = vld [vmem:[%s234 + $0x48] sm:$0xff]
      %v289 = vld [vmem:[%s234 + $0x50] sm:$0xff]
      %v290 = vld [vmem:[%s234 + $0x58] sm:$0xff]
      %v291 = vld [vmem:[%s234 + $0x60] sm:$0xff]
      %v292 = vld [vmem:[%s234 + $0x68] sm:$0xff]
      %v293 = vld [vmem:[%s234 + $0x70] sm:$0xff]
      %v294 = vld [vmem:[%s234 + $0x78] sm:$0xff]
      %v295 = vmul.f32 %v263, %v279
      %v296 = vmul.f32 %v264, %v280
      %v297 = vmul.f32 %v265, %v281
      %v298 = vmul.f32 %v266, %v282
      %v299 = vmul.f32 %v267, %v283
      %v300 = vmul.f32 %v268, %v284
      %v301 = vmul.f32 %v269, %v285
      %v302 = vmul.f32 %v270, %v286
      %v303 = vmul.f32 %v271, %v287
      %v304 = vmul.f32 %v272, %v288
      %v305 = vmul.f32 %v273, %v289
      %v306 = vmul.f32 %v274, %v290
      %v307 = vmul.f32 %v275, %v291
      %v308 = vmul.f32 %v276, %v292
      %v309 = vmul.f32 %v277, %v293
      %v310 = vmul.f32 %v278, %v294
      %v311 = vsub.f32 %v295, %v303
      %v312 = vsub.f32 %v296, %v304
      %v313 = vsub.f32 %v297, %v305
      %v314 = vsub.f32 %v298, %v306
      %v315 = vsub.f32 %v299, %v307
      %v316 = vsub.f32 %v300, %v308
      %v317 = vsub.f32 %v301, %v309
      %v318 = vsub.f32 %v302, %v310
      %v319 = vmul.f32 %v263, %v287
      %v320 = vmul.f32 %v264, %v288
      %v321 = vmul.f32 %v265, %v289
      %v322 = vmul.f32 %v266, %v290
      %v323 = vmul.f32 %v267, %v291
      %v324 = vmul.f32 %v268, %v292
      %v325 = vmul.f32 %v269, %v293
      %v326 = vmul.f32 %v270, %v294
      %v327 = vmul.f32 %v271, %v279
      %v328 = vmul.f32 %v272, %v280
      %v329 = vmul.f32 %v273, %v281
      %v330 = vmul.f32 %v274, %v282
      %v331 = vmul.f32 %v275, %v283
      %v332 = vmul.f32 %v276, %v284
      %v333 = vmul.f32 %v277, %v285
      %v334 = vmul.f32 %v278, %v286
      %v335 = vadd.f32 %v319, %v327
      %v336 = vadd.f32 %v320, %v328
      %v337 = vadd.f32 %v321, %v329
      %v338 = vadd.f32 %v322, %v330
      %v339 = vadd.f32 %v323, %v331
      %v340 = vadd.f32 %v324, %v332
      %v341 = vadd.f32 %v325, %v333
      %v342 = vadd.f32 %v326, %v334
      %v343 = vld [vmem:[#allocation2] sm:$0xff]
      %v344 = vld [vmem:[#allocation2 + $0x8] sm:$0xff]
      %v345 = vld [vmem:[#allocation2 + $0x10] sm:$0xff]
      %v346 = vld [vmem:[#allocation2 + $0x18] sm:$0xff]
      %v347 = vld [vmem:[#allocation2 + $0x20] sm:$0xff]
      %v348 = vld [vmem:[#allocation2 + $0x28] sm:$0xff]
      %v349 = vld [vmem:[#allocation2 + $0x30] sm:$0xff]
      %v350 = vld [vmem:[#allocation2 + $0x38] sm:$0xff]
      %v351 = vadd.f32 %v343, %v311
      %v352 = vadd.f32 %v344, %v312
      %v353 = vadd.f32 %v345, %v313
      %v354 = vadd.f32 %v346, %v314
      %v355 = vadd.f32 %v347, %v315
      %v356 = vadd.f32 %v348, %v316
      %v357 = vadd.f32 %v349, %v317
      %v358 = vadd.f32 %v350, %v318
      %359 = vst [vmem:[#allocation2] sm:$0xff] %v351
      %360 = vst [vmem:[#allocation2 + $0x8] sm:$0xff] %v352
      %361 = vst [vmem:[#allocation2 + $0x10] sm:$0xff] %v353
      %362 = vst [vmem:[#allocation2 + $0x18] sm:$0xff] %v354
      %363 = vst [vmem:[#allocation2 + $0x20] sm:$0xff] %v355
      %364 = vst [vmem:[#allocation2 + $0x28] sm:$0xff] %v356
      %365 = vst [vmem:[#allocation2 + $0x30] sm:$0xff] %v357
      %366 = vst [vmem:[#allocation2 + $0x38] sm:$0xff] %v358
      %s367 = scalar_lea.vmem [#allocation2], 64
      %v368 = vld [vmem:[%s367] sm:$0xff]
      %v369 = vld [vmem:[%s367 + $0x8] sm:$0xff]
      %v370 = vld [vmem:[%s367 + $0x10] sm:$0xff]
      %v371 = vld [vmem:[%s367 + $0x18] sm:$0xff]
      %v372 = vld [vmem:[%s367 + $0x20] sm:$0xff]
      %v373 = vld [vmem:[%s367 + $0x28] sm:$0xff]
      %v374 = vld [vmem:[%s367 + $0x30] sm:$0xff]
      %v375 = vld [vmem:[%s367 + $0x38] sm:$0xff]
      %v376 = vadd.f32 %v368, %v335
      %v377 = vadd.f32 %v369, %v336
      %v378 = vadd.f32 %v370, %v337
      %v379 = vadd.f32 %v371, %v338
      %v380 = vadd.f32 %v372, %v339
      %v381 = vadd.f32 %v373, %v340
      %v382 = vadd.f32 %v374, %v341
      %v383 = vadd.f32 %v375, %v342
      %384 = vst [vmem:[%s367] sm:$0xff] %v376
      %385 = vst [vmem:[%s367 + $0x8] sm:$0xff] %v377
      %386 = vst [vmem:[%s367 + $0x10] sm:$0xff] %v378
      %387 = vst [vmem:[%s367 + $0x18] sm:$0xff] %v379
      %388 = vst [vmem:[%s367 + $0x20] sm:$0xff] %v380
      %389 = vst [vmem:[%s367 + $0x28] sm:$0xff] %v381
      %390 = vst [vmem:[%s367 + $0x30] sm:$0xff] %v382
      %391 = vst [vmem:[%s367 + $0x38] sm:$0xff] %v383
      // Predicated region
      $region33: #{cbp_forward.3} parent=27 // pred_check
        %p392 = pneg %p243
      $region34: #{cbp_forward.3} parent=27 // pred_check_branch
        %394 = sbr.rel (%p392) target = $region36
      $region35: #{cbp_forward.3} parent=27 // pred_region
        %v395 = vld [vmem:[#allocation2] sm:$0xff]
        %v396 = vld [vmem:[#allocation2 + $0x8] sm:$0xff]
        %v397 = vld [vmem:[#allocation2 + $0x10] sm:$0xff]
        %v398 = vld [vmem:[#allocation2 + $0x18] sm:$0xff]
        %v399 = vld [vmem:[#allocation2 + $0x20] sm:$0xff]
        %v400 = vld [vmem:[#allocation2 + $0x28] sm:$0xff]
        %v401 = vld [vmem:[#allocation2 + $0x30] sm:$0xff]
        %v402 = vld [vmem:[#allocation2 + $0x38] sm:$0xff]
        %v403 = vld [vmem:[#allocation2 + $0x40] sm:$0xff]
        %v404 = vld [vmem:[#allocation2 + $0x48] sm:$0xff]
        %v405 = vld [vmem:[#allocation2 + $0x50] sm:$0xff]
        %v406 = vld [vmem:[#allocation2 + $0x58] sm:$0xff]
        %v407 = vld [vmem:[#allocation2 + $0x60] sm:$0xff]
        %v408 = vld [vmem:[#allocation2 + $0x68] sm:$0xff]
        %v409 = vld [vmem:[#allocation2 + $0x70] sm:$0xff]
        %v410 = vld [vmem:[#allocation2 + $0x78] sm:$0xff]
        %v411 = vadd.f32 %v395, %v396
        %v412 = vadd.f32 %v411, %v397
        %v413 = vadd.f32 %v412, %v398
        %v414 = vadd.f32 %v413, %v399
        %v415 = vadd.f32 %v414, %v400
        %v416 = vadd.f32 %v415, %v401
        %v417 = vadd.f32 %v416, %v402
        %v418 = vrot.slane %v417, 4
        %v419 = vadd.f32 %v417, %v418
        %v420 = vrot.slane %v419, 2
        %v421 = vadd.f32 %v419, %v420
        %v422 = vrot.slane %v421, 1
        %v423 = vadd.f32 %v421, %v422
        %v424 = vadd.f32 %v403, %v404
        %v425 = vadd.f32 %v424, %v405
        %v426 = vadd.f32 %v425, %v406
        %v427 = vadd.f32 %v426, %v407
        %v428 = vadd.f32 %v427, %v408
        %v429 = vadd.f32 %v428, %v409
        %v430 = vadd.f32 %v429, %v410
        %v431 = vrot.slane %v430, 4
        %v432 = vadd.f32 %v430, %v431
        %v433 = vrot.slane %v432, 2
        %v434 = vadd.f32 %v432, %v433
        %v435 = vrot.slane %v434, 1
        %v436 = vadd.f32 %v434, %v435
        %437 = vst [vmem:[%s242] sm:$0x1] %v423
        %438 = vst [vmem:[%s242 + $0x1] sm:$0x1] %v436
      $region36: #{cbp_forward.3} parent=27 // pred_fallthru
        _
      %p439 = scmp.lt.s32.totalorder %s18, 1
      %s440 = scalar_select %p439, %s18, 1
      %p441 = scmp.lt.s32.totalorder %s19, 0
      %s442 = scalar_select %p441, %s19, 0
      %s443 = smul.addr %s440, 2
      %s444 = sadd.s32 %s442, %s443
      %s445 = scalar_lea.vmem %s2, %s444
      // Predicated region
      $region37: #{cbp_forward.3} parent=27 // pred_check
        %p446 = pneg %p112
      $region38: #{cbp_forward.3} parent=27 // pred_check_branch
        %448 = sbr.rel (%p446) target = $region40
      $region39: #{cbp_forward.3} parent=27 // pred_region
        _
      $region40: #{cbp_forward.3} parent=27 // pred_fallthru
        _
    $region28: #{cbp_forward.3} parent=5 // pred_fallthru
      _
    %p449 = scmp.le.s32.totalorder 2, %s8
    // Predicated region
    $region41: #{cbp_forward.3} parent=5 // pred_check
      %p450 = pneg %p449
    $region42: #{cbp_forward.3} parent=5 // pred_check_branch
      %452 = sbr.rel (%p450) target = $region44
    $region43: #{cbp_forward.3} parent=5 // pred_region
      %s453 = ssub.s32 %s8, 2
      // Predicated region
      $region45: #{cbp_forward.3} parent=43 // pred_check
        %p454 = pneg %p118
      $region46: #{cbp_forward.3} parent=43 // pred_check_branch
        %456 = sbr.rel (%p454) target = $region48
      $region47: #{cbp_forward.3} parent=43 // pred_region
        %p457 = scmp.lt.s32.totalorder %s21, 1
        %s458 = scalar_select %p457, %s21, 1
        %p459 = scmp.lt.s32.totalorder %s22, 0
        %s460 = scalar_select %p459, %s22, 0
        %s461 = smul.addr %s458, 2
        %s462 = sadd.s32 %s460, %s461
        %s463 = scalar_lea.vmem %s2, %s462
      $region48: #{cbp_forward.3} parent=43 // pred_fallthru
        _
    $region44: #{cbp_forward.3} parent=5 // pred_fallthru
      _
  $region6: #{cbp_forward.3} parent=0 // loop_footer
    %s12 = sadd.s32 1, %s8
  $region7: #{cbp_forward.3} parent=0 // loop_footer_branch
    %7 = sbr.rel target = $region3
  $region8: #{cbp_forward.3} parent=0 // loop_exit
    _

</llo_original>
